<compile_context>
chip_gen: v7x
topology: tpu7x:2x2x1
jax: 0.10.0
libtpu: 0.0.40
codegen_flags: <defaults>
</compile_context>

<pallas_src>
import math

import jax
import jax.numpy as jnp
import numpy as np
from jax import lax
from jax.experimental import pallas as pl
from jax.experimental.pallas import tpu as pltpu


# =============================================================================
# Fused kernel for the whole Conv1DBlock stack
# =============================================================================
def _make_fused_kernel(block_metas, bt, compute_dtype):
    n_blocks = len(block_metas)
    n_out = sum(1 for m in block_metas if m['ret'])

    def kernel(*refs):
        x_ref = refs[0]
        param_refs = refs[1:1 + 2 * n_blocks]
        out_refs = refs[1 + 2 * n_blocks:1 + 2 * n_blocks + n_out]
        cols_ref = refs[1 + 2 * n_blocks + n_out]

        # Folded activation carried between blocks: (h_out, bt*w_out) f32,
        # pooled channels on sublanes, batch (x) pooled length on lanes.
        cur = None
        out_idx = 0

        for blk, m in enumerate(block_metas):
            w_ref = param_refs[2 * blk]
            ln_ref = param_refs[2 * blk + 1]
            K, pad = m['K'], m['pad']
            c_in, c_out = m['c_in'], m['c_out']
            L, l_conv = m['length'], m['l_conv']
            ph, pw = m['ph'], m['pw']
            h_out, w_out = m['h_out'], m['w_out']
            fold = bt * l_conv
            rows_total = K * c_in
            transpose_in = m['transpose_in']

            # ---- source for this block's im2col -----------------------------
            if blk > 0:
                # One 2-D transpose per dim-switch boundary (XLU); otherwise
                # the previous block's folded output is already in conv
                # orientation.
                cur_src = cur.T if transpose_in else cur
                # transpose_in: (bt*c_in, L)   batch on sublanes
                # otherwise   : (c_in, bt*L)   batch on lanes

            # ---- im2col into the single shared VMEM scratch ------------------
            # Only the <= 2*pad boundary columns per (k, batch) segment are
            # zeroed; everything else is written exactly once.
            for b in range(bt):
                if blk == 0:
                    plane = x_ref[b]                       # (S, E) logical plane
                    if transpose_in:
                        plane = plane.T                    # (E, S) for dim='sequence'
                else:
                    if transpose_in:
                        plane = cur_src[b * c_in:(b + 1) * c_in, :]
                    else:
                        plane = cur_src[:, b * L:(b + 1) * L]
                plane = plane.astype(compute_dtype)        # (c_in, L)
                base = b * l_conv
                for k in range(K):
                    rs, re = k * c_in, (k + 1) * c_in
                    lo = max(0, pad - k)
                    hi = min(l_conv, L + pad - k)
                    if hi <= lo:                           # window fully in padding
                        cols_ref[rs:re, base:base + l_conv] = (
                            jnp.zeros((c_in, l_conv), compute_dtype))
                        continue
                    if lo > 0:
                        cols_ref[rs:re, base:base + lo] = (
                            jnp.zeros((c_in, lo), compute_dtype))
                    if hi < l_conv:
                        cols_ref[rs:re, base + hi:base + l_conv] = (
                            jnp.zeros((c_in, l_conv - hi), compute_dtype))
                    src_lo = lo + k - pad
                    cols_ref[rs:re, base + lo:base + hi] = plane[:, src_lo:src_lo + hi - lo]

            # ---- Conv1d: ONE MXU matmul over the whole folded batch ----------
            # NOTE: Conv1d bias intentionally omitted.  LayerNorm over the conv
            # length axis follows immediately, so a per-out-channel constant
            # cancels exactly in the LN mean and does not change the variance.
            # This is valid ONLY for this Conv1d -> LayerNorm(l_conv) layout.
            cols = cols_ref[0:rows_total, 0:fold]
            y = jnp.dot(w_ref[...], cols,
                        preferred_element_type=jnp.float32)       # (c_out, fold) f32

            # ---- LayerNorm per (channel, batch segment), fully batched -------
            if bt == 1:
                mean = jnp.mean(y, axis=-1, keepdims=True)
                cen = y - mean
                var = jnp.mean(cen * cen, axis=-1, keepdims=True)
            else:
                # segment-average and segment-broadcast matrices from iota
                fi = lax.broadcasted_iota(jnp.int32, (fold, bt), 0)
                bi = lax.broadcasted_iota(jnp.int32, (fold, bt), 1)
                s_avg = ((fi >= bi * l_conv) &
                         (fi < bi * l_conv + l_conv)).astype(jnp.float32) * (1.0 / l_conv)
                bj = lax.broadcasted_iota(jnp.int32, (bt, fold), 0)
                fj = lax.broadcasted_iota(jnp.int32, (bt, fold), 1)
                s_bc = ((fj >= bj * l_conv) &
                        (fj < bj * l_conv + l_conv)).astype(jnp.float32)
                mean = jnp.dot(jnp.dot(y, s_avg, preferred_element_type=jnp.float32),
                               s_bc, preferred_element_type=jnp.float32)
                cen = y - mean
                var = jnp.dot(jnp.dot(cen * cen, s_avg, preferred_element_type=jnp.float32),
                              s_bc, preferred_element_type=jnp.float32)

            ln = ln_ref[...]                                # (2, fold): gamma;beta tiled per batch
            z = cen * lax.rsqrt(var + 1e-5) * ln[0:1, :] + ln[1:2, :]
            z = jnp.maximum(z, 0.0)

            # ---- MaxPool over channels (sublanes) on the VPU ------------------
            # Weights were permuted host-side so the ph pooling partners of each
            # output row live in contiguous h_out-row groups; floor remainder
            # rows (if any) sit at the end and are simply never read.
            p = z[0:h_out, :]
            for i in range(1, ph):
                p = jnp.maximum(p, z[i * h_out:(i + 1) * h_out, :])

            # ---- MaxPool over length (lanes): pw batched stride-select matmuls
            #      covering every batch segment at once (l_conv % pw == 0) ------
            if pw == 1:
                res = p
            else:
                out_fold = bt * w_out
                fr = lax.broadcasted_iota(jnp.int32, (fold, out_fold), 0)
                gc = lax.broadcasted_iota(jnp.int32, (fold, out_fold), 1)
                res = None
                for j in range(pw):
                    sel = (fr == gc * pw + j).astype(jnp.float32)
                    t = jnp.dot(p, sel, preferred_element_type=jnp.float32)
                    res = t if res is None else jnp.maximum(res, t)

            cur = res                                       # (h_out, bt*w_out)
            if m['ret']:
                out_refs[out_idx][...] = res.astype(out_refs[out_idx].dtype)
                out_idx += 1

    return kernel


# =============================================================================
# Wrapper: one fused pallas_call for the whole stack
# =============================================================================
def conv_model_fused_forward(x, kernel_params, block_metas, *, batch_tile=None,
                             compute_dtype=jnp.float32, vmem_limit_bytes=None):
    """Run the whole Conv1DBlock stack in a single fused pallas_call.

    batch_tile:   None -> whole batch per grid step (right choice on v5e/v6e,
                  1 TC).  On v7x set batch_tile=B//2 so the 'parallel' grid
                  axis is sharded across its two TensorCores.
    compute_dtype: jnp.float32 (default, exact vs reference) or jnp.bfloat16
                  for the conv matmul operands (f32 accumulation) on v5e/v6e.
    vmem_limit_bytes: raise on v5e (16 MiB default scoped VMEM) for large
                  shapes.
    """
    B, S, E = x.shape
    bt = B if batch_tile is None else batch_tile
    assert B % bt == 0, "batch must be divisible by batch_tile"
    G = B // bt

    inputs = [x]
    in_specs = [pl.BlockSpec((bt, S, E), lambda i: (i, 0, 0))]
    for (w, ln) in kernel_params:
        w_in = w.astype(compute_dtype)
        ln_t = jnp.tile(ln, (1, bt))                    # (2, bt*l_conv), lane-major
        inputs += [w_in, ln_t]
        in_specs += [pl.BlockSpec(w_in.shape, lambda i: (0, 0)),
                     pl.BlockSpec(ln_t.shape, lambda i: (0, 0))]

    out_shapes, out_specs = [], []
    for m in block_metas:
        if m['ret']:
            # lane-dense folded output slab; layout fix-up happens in XLA below
            out_shapes.append(jax.ShapeDtypeStruct(
                (G, m['h_out'], bt * m['w_out']), x.dtype))
            out_specs.append(pl.BlockSpec(
                (None, m['h_out'], bt * m['w_out']), lambda i: (i, 0, 0)))

    # single shared im2col scratch, reused by every block (peak = max, not sum)
    max_rows = max(m['K'] * m['c_in'] for m in block_metas)
    max_fold = max(bt * m['l_conv'] for m in block_metas)
    scratch_shapes = [pltpu.VMEM((max_rows, max_fold), compute_dtype)]

    kernel = _make_fused_kernel(block_metas, bt, compute_dtype)

    cp_kwargs = dict(dimension_semantics=("parallel",))
    if vmem_limit_bytes is not None:
        cp_kwargs['vmem_limit_bytes'] = vmem_limit_bytes

    outs = pl.pallas_call(
        kernel,
        grid=(G,),
        in_specs=in_specs,
        out_specs=out_specs,
        out_shape=out_shapes,
        scratch_shapes=scratch_shapes,
        compiler_params=pltpu.CompilerParams(**cp_kwargs),
    )(*inputs)
    if not isinstance(outs, (list, tuple)):
        outs = [outs]

    # Wrapper-side (XLA) layout plumbing: folded slab -> logical (B, seq, feat)
    results = []
    ret_metas = [m for m in block_metas if m['ret']]
    for m, o in zip(ret_metas, outs):
        h_out, w_out = m['h_out'], m['w_out']
        o4 = o.reshape(G, h_out, bt, w_out)
        if m['dim'] == 'features':
            results.append(jnp.transpose(o4, (0, 2, 1, 3)).reshape(B, h_out, w_out))
        else:
            results.append(jnp.transpose(o4, (0, 2, 3, 1)).reshape(B, w_out, h_out))
    return results


# =============================================================================
# Pure-JAX reference (mirrors the PyTorch module exactly, bias included)
# =============================================================================
def conv1d_block_reference(x, params, *, dim, conv_padding, pool_kernel_size):
    if dim == 'sequence':
        x = jnp.transpose(x, (0, 2, 1))
    weight, bias = params['w'], params['b']
    c_out, _, ksize = weight.shape
    xp = jnp.pad(x, ((0, 0), (0, 0), (conv_padding, conv_padding)))
    l_conv = xp.shape[-1] - ksize + 1
    cols = jnp.stack([xp[:, :, k:k + l_conv] for k in range(ksize)], axis=2)
    y = jnp.einsum('oik,bikl->bol', weight, cols,
                   preferred_element_type=jnp.float32) + bias[None, :, None]
    mean = y.mean(-1, keepdims=True)
    var = ((y - mean) ** 2).mean(-1, keepdims=True)
    y = (y - mean) / jnp.sqrt(var + 1e-5) * params['ln_w'] + params['ln_b']
    y = jnp.maximum(y, 0.0)
    if dim == 'features':
        ph, pw = pool_kernel_size['sequence'], pool_kernel_size['features']
    else:
        ph, pw = pool_kernel_size['features'], pool_kernel_size['sequence']
    h_out, w_out = c_out // ph, l_conv // pw
    y = y[:, :h_out * ph, :w_out * pw].reshape(x.shape[0], h_out, ph, w_out, pw)
    y = y.max(axis=(2, 4))
    if dim == 'sequence':
        y = jnp.transpose(y, (0, 2, 1))
    return y


# =============================================================================
# ConvModel
# =============================================================================
def _init_conv_block_params(key, in_channels, out_channels, ksize, ln_size):
    k_w, k_b = jax.random.split(key)
    bound = 1.0 / math.sqrt(in_channels * ksize)
    w = jax.random.uniform(k_w, (out_channels, in_channels, ksize),
                           minval=-bound, maxval=bound, dtype=jnp.float32)
    b = jax.random.uniform(k_b, (out_channels,),
                           minval=-bound, maxval=bound, dtype=jnp.float32)
    return dict(w=w, b=b,
                ln_w=jnp.ones((ln_size,), jnp.float32),
                ln_b=jnp.zeros((ln_size,), jnp.float32))


class ConvModelPallas:
    # TODO(synk): the `ffnn` head (`LinearBlock`) is not defined in the provided
    # source, so only the hidden_layers=[] path of ConvModel is implemented.
    def __init__(self, blocks_kwargs, sequence_size, embedding_size, key,
                 compute_dtype=jnp.float32):
        self.blocks_kwargs = blocks_kwargs
        self.compute_dtype = compute_dtype
        self.return_feature_map = {k: kw['return_feature_map']
                                   for k, kw in blocks_kwargs.items()}
        assert list(self.return_feature_map.values())[-1], \
            "last block must return its feature map"

        size = {'sequence': sequence_size, 'features': embedding_size}
        self.params = {}
        self.block_meta = []
        prev_dim = 'features'     # input x (B, seq, feat) matches 'features' orientation
        for name, kw in blocks_kwargs.items():
            dim = kw['dim']
            K, pad = kw['conv_kernel_size'], kw['conv_padding']
            c_in, c_out = kw['in_channels'], kw['out_channels']
            pool = kw['pool_kernel_size']
            length = size[dim]
            chan = size['features'] if dim == 'sequence' else size['sequence']
            assert chan == c_in, f"in_channels mismatch for block '{name}'"
            l_conv = length + 2 * pad - K + 1
            if dim == 'features':
                ph, pw = pool['sequence'], pool['features']
            else:
                ph, pw = pool['features'], pool['sequence']
            h_out, w_out = c_out // ph, l_conv // pw
            # TODO(synk): the in-kernel lane pool assumes the pooled length axis
            # divides exactly (PyTorch floor mode with no remainder).
            assert l_conv % pw == 0, \
                f"block '{name}': l_conv={l_conv} must be divisible by pool window {pw}"

            key, sub = jax.random.split(key)
            self.params[name] = _init_conv_block_params(sub, c_in, c_out, K, l_conv)
            self.block_meta.append(dict(
                name=name, dim=dim, K=K, pad=pad, c_in=c_in, c_out=c_out,
                length=length, l_conv=l_conv, ph=ph, pw=pw,
                h_out=h_out, w_out=w_out, ret=kw['return_feature_map'],
                transpose_in=(dim != prev_dim)))
            prev_dim = dim

            # output-size bookkeeping (mirrors the PyTorch Conv1DBlock)
            new_size = {'sequence': c_out, 'features': c_out}
            for d, v in pool.items():
                if d == dim:
                    new_size[d] = (l_conv - v) // v + 1
                else:
                    new_size[d] = (new_size[d] - v) // v + 1
            size = new_size
        self.output_size = size

        # kernel-side parameter layouts (precomputed once).  The out-channel
        # permutation groups the ph pooling partners of each pooled row into
        # contiguous h_out-row blocks so the channel pool is pure VPU maxes.
        self.kernel_params = []
        for m in self.block_meta:
            p = self.params[m['name']]
            w_flat = jnp.transpose(p['w'], (0, 2, 1)).reshape(
                m['c_out'], m['K'] * m['c_in'])            # rows ordered [k, c_in]
            ph, h_out, c_out = m['ph'], m['h_out'], m['c_out']
            perm = [r * ph + i for i in range(ph) for r in range(h_out)]
            perm += list(range(h_out * ph, c_out))         # floor remainder (unused)
            w_perm = w_flat[jnp.array(perm, dtype=jnp.int32)]
            ln = jnp.stack([p['ln_w'], p['ln_b']], axis=0)  # (2, l_conv), lane-major
            self.kernel_params.append((w_perm, ln))

    def __call__(self, x, *, batch_tile=None, vmem_limit_bytes=None):
        outs = conv_model_fused_forward(
            x, self.kernel_params, self.block_meta,
            batch_tile=batch_tile, compute_dtype=self.compute_dtype,
            vmem_limit_bytes=vmem_limit_bytes)
        if sum(self.return_feature_map.values()) > 1:
            returned = [m for m in self.block_meta if m['ret']]
            return {m['name']: o for m, o in zip(returned, outs)}
        return outs[0]

    def reference(self, x):
        results = {}
        for m in self.block_meta:
            x = conv1d_block_reference(
                x, self.params[m['name']], dim=m['dim'], conv_padding=m['pad'],
                pool_kernel_size=self.blocks_kwargs[m['name']]['pool_kernel_size'])
            if m['ret']:
                results[m['name']] = x
        if sum(self.return_feature_map.values()) > 1:
            return results
        return x


# =============================================================================
if __name__ == "__main__":
    key = jax.random.PRNGKey(0)
    k_x, k_p = jax.random.split(key)

    batch, sequence_size, embedding_size = 2, 8, 32
    blocks_kwargs = {
        'block1': dict(in_channels=sequence_size, out_channels=16,
                       conv_kernel_size=3, conv_padding=1,
                       pool_kernel_size={'sequence': 2, 'features': 2},
                       dim='features', return_feature_map=False),
        'block2': dict(in_channels=16, out_channels=12,
                       conv_kernel_size=3, conv_padding=1,
                       pool_kernel_size={'sequence': 2, 'features': 2},
                       dim='sequence', return_feature_map=True),
    }

    x = jax.random.normal(k_x, (batch, sequence_size, embedding_size),
                          dtype=jnp.float32)

    model = ConvModelPallas(blocks_kwargs, sequence_size, embedding_size, key=k_p)

    out = jax.block_until_ready(model(x))
    ref = jax.block_until_ready(model.reference(x))

    np.testing.assert_allclose(np.asarray(out), np.asarray(ref),
                               rtol=1e-3, atol=1e-3)
    print("KERNEL_OK")
</pallas_src>

<mosaic_0001>
module attributes {stable_mosaic.version = 11 : i64} {
  func.func @kernel(%arg0: i32, %arg1: memref<2x8x32xf32, #tpu.memory_space<vmem>>, %arg2: memref<16x24xf32, #tpu.memory_space<vmem>>, %arg3: memref<2x64xf32, #tpu.memory_space<vmem>>, %arg4: memref<12x48xf32, #tpu.memory_space<vmem>>, %arg5: memref<2x16xf32, #tpu.memory_space<vmem>>, %arg6: memref<1x6x8xf32, #tpu.memory_space<vmem>>, %arg7: memref<48x64xf32, #tpu.memory_space<vmem>>) attributes {dimension_semantics = [#tpu.dimension_semantics<parallel>], iteration_bounds = array<i64: 1>, scalar_prefetch = 0 : i64, scratch_operands = 1 : i64, tpu.core_type = #tpu.core_type<tc>, window_params = [{transform_indices = @transform_0, window_bounds = array<i64: 2, 8, 32>}, {pipeline_mode = #tpu.pipeline_mode<synchronous>, transform_indices = @transform_1, window_bounds = array<i64: 16, 24>}, {pipeline_mode = #tpu.pipeline_mode<synchronous>, transform_indices = @transform_2, window_bounds = array<i64: 2, 64>}, {pipeline_mode = #tpu.pipeline_mode<synchronous>, transform_indices = @transform_3, window_bounds = array<i64: 12, 48>}, {pipeline_mode = #tpu.pipeline_mode<synchronous>, transform_indices = @transform_4, window_bounds = array<i64: 2, 16>}, {transform_indices = @transform_5, window_bounds = array<i64: 1, 6, 8>}]} {
    %c0 = arith.constant 0 : index
    %c0_0 = arith.constant 0 : index
    %c0_1 = arith.constant 0 : index
    %0 = vector.load %arg1[%c0, %c0_0, %c0_1] : memref<2x8x32xf32, #tpu.memory_space<vmem>>, vector<1x8x32xf32>
    %1 = vector.shape_cast %0 : vector<1x8x32xf32> to vector<8x32xf32>
    %cst = arith.constant 0.000000e+00 : f32
    %2 = vector.broadcast %cst : f32 to vector<8x1xf32>
    %c0_2 = arith.constant 0 : index
    %c0_3 = arith.constant 0 : index
    %3 = vector.load %arg7[%c0_2, %c0_3] : memref<48x64xf32, #tpu.memory_space<vmem>>, vector<8x1xf32>
    tpu.vector_store %arg7[%c0_2, %c0_3], %2 {strides = array<i32>} : memref<48x64xf32, #tpu.memory_space<vmem>>, vector<8x1xf32>,
    %4 = vector.extract_strided_slice %1 {offsets = [0, 0], sizes = [8, 31], strides = [1, 1]} : vector<8x32xf32> to vector<8x31xf32>
    %c0_4 = arith.constant 0 : index
    %c1 = arith.constant 1 : index
    %5 = vector.load %arg7[%c0_4, %c1] : memref<48x64xf32, #tpu.memory_space<vmem>>, vector<8x31xf32>
    tpu.vector_store %arg7[%c0_4, %c1], %4 {strides = array<i32>} : memref<48x64xf32, #tpu.memory_space<vmem>>, vector<8x31xf32>,
    %c8 = arith.constant 8 : index
    %c0_5 = arith.constant 0 : index
    %6 = vector.load %arg7[%c8, %c0_5] : memref<48x64xf32, #tpu.memory_space<vmem>>, vector<8x32xf32>
    tpu.vector_store %arg7[%c8, %c0_5], %1 {strides = array<i32>} : memref<48x64xf32, #tpu.memory_space<vmem>>, vector<8x32xf32>,
    %cst_6 = arith.constant 0.000000e+00 : f32
    %7 = vector.broadcast %cst_6 : f32 to vector<8x1xf32>
    %c16 = arith.constant 16 : index
    %c31 = arith.constant 31 : index
    %8 = vector.load %arg7[%c16, %c31] : memref<48x64xf32, #tpu.memory_space<vmem>>, vector<8x1xf32>
    tpu.vector_store %arg7[%c16, %c31], %7 {strides = array<i32>} : memref<48x64xf32, #tpu.memory_space<vmem>>, vector<8x1xf32>,
    %9 = vector.extract_strided_slice %1 {offsets = [0, 1], sizes = [8, 31], strides = [1, 1]} : vector<8x32xf32> to vector<8x31xf32>
    %c16_7 = arith.constant 16 : index
    %c0_8 = arith.constant 0 : index
    %10 = vector.load %arg7[%c16_7, %c0_8] : memref<48x64xf32, #tpu.memory_space<vmem>>, vector<8x31xf32>
    tpu.vector_store %arg7[%c16_7, %c0_8], %9 {strides = array<i32>} : memref<48x64xf32, #tpu.memory_space<vmem>>, vector<8x31xf32>,
    %c1_9 = arith.constant 1 : index
    %c0_10 = arith.constant 0 : index
    %c0_11 = arith.constant 0 : index
    %11 = vector.load %arg1[%c1_9, %c0_10, %c0_11] : memref<2x8x32xf32, #tpu.memory_space<vmem>>, vector<1x8x32xf32>
    %12 = vector.shape_cast %11 : vector<1x8x32xf32> to vector<8x32xf32>
    %cst_12 = arith.constant 0.000000e+00 : f32
    %13 = vector.broadcast %cst_12 : f32 to vector<8x1xf32>
    %c0_13 = arith.constant 0 : index
    %c32 = arith.constant 32 : index
    %14 = vector.load %arg7[%c0_13, %c32] : memref<48x64xf32, #tpu.memory_space<vmem>>, vector<8x1xf32>
    tpu.vector_store %arg7[%c0_13, %c32], %13 {strides = array<i32>} : memref<48x64xf32, #tpu.memory_space<vmem>>, vector<8x1xf32>,
    %15 = vector.extract_strided_slice %12 {offsets = [0, 0], sizes = [8, 31], strides = [1, 1]} : vector<8x32xf32> to vector<8x31xf32>
    %c0_14 = arith.constant 0 : index
    %c33 = arith.constant 33 : index
    %16 = vector.load %arg7[%c0_14, %c33] : memref<48x64xf32, #tpu.memory_space<vmem>>, vector<8x31xf32>
    tpu.vector_store %arg7[%c0_14, %c33], %15 {strides = array<i32>} : memref<48x64xf32, #tpu.memory_space<vmem>>, vector<8x31xf32>,
    %c8_15 = arith.constant 8 : index
    %c32_16 = arith.constant 32 : index
    %17 = vector.load %arg7[%c8_15, %c32_16] : memref<48x64xf32, #tpu.memory_space<vmem>>, vector<8x32xf32>
    tpu.vector_store %arg7[%c8_15, %c32_16], %12 {strides = array<i32>} : memref<48x64xf32, #tpu.memory_space<vmem>>, vector<8x32xf32>,
    %cst_17 = arith.constant 0.000000e+00 : f32
    %18 = vector.broadcast %cst_17 : f32 to vector<8x1xf32>
    %c16_18 = arith.constant 16 : index
    %c63 = arith.constant 63 : index
    %19 = vector.load %arg7[%c16_18, %c63] : memref<48x64xf32, #tpu.memory_space<vmem>>, vector<8x1xf32>
    tpu.vector_store %arg7[%c16_18, %c63], %18 {strides = array<i32>} : memref<48x64xf32, #tpu.memory_space<vmem>>, vector<8x1xf32>,
    %20 = vector.extract_strided_slice %12 {offsets = [0, 1], sizes = [8, 31], strides = [1, 1]} : vector<8x32xf32> to vector<8x31xf32>
    %c16_19 = arith.constant 16 : index
    %c32_20 = arith.constant 32 : index
    %21 = vector.load %arg7[%c16_19, %c32_20] : memref<48x64xf32, #tpu.memory_space<vmem>>, vector<8x31xf32>
    tpu.vector_store %arg7[%c16_19, %c32_20], %20 {strides = array<i32>} : memref<48x64xf32, #tpu.memory_space<vmem>>, vector<8x31xf32>,
    %c0_21 = arith.constant 0 : index
    %c0_22 = arith.constant 0 : index
    %22 = vector.load %arg7[%c0_21, %c0_22] : memref<48x64xf32, #tpu.memory_space<vmem>>, vector<24x64xf32>
    %c0_23 = arith.constant 0 : index
    %c0_24 = arith.constant 0 : index
    %23 = vector.load %arg2[%c0_23, %c0_24] : memref<16x24xf32, #tpu.memory_space<vmem>>, vector<16x24xf32>
    %cst_25 = arith.constant dense<0.000000e+00> : vector<16x64xf32>
    %24 = tpu.matmul %23, %22, %cst_25 {dimension_numbers = #tpu.dot_dimension_numbers<[1], [0], [0], [1], [0, 0, 1, 1], [], []>} : vector<16x24xf32>, vector<24x64xf32>, vector<16x64xf32> -> vector<16x64xf32>
    %25 = tpu.iota {dimensions = array<i32: 0>} : vector<64x2xi32>
    %26 = tpu.iota {dimensions = array<i32: 1>} : vector<64x2xi32>
    %c32_i32 = arith.constant 32 : i32
    %27 = vector.broadcast %c32_i32 : i32 to vector<64x2xi32>
    %28 = arith.muli %26, %27 : vector<64x2xi32>
    %29 = arith.cmpi sge, %25, %28 : vector<64x2xi32>
    %c32_i32_26 = arith.constant 32 : i32
    %30 = vector.broadcast %c32_i32_26 : i32 to vector<64x2xi32>
    %31 = arith.muli %26, %30 : vector<64x2xi32>
    %c32_i32_27 = arith.constant 32 : i32
    %32 = vector.broadcast %c32_i32_27 : i32 to vector<64x2xi32>
    %33 = arith.addi %31, %32 : vector<64x2xi32>
    %34 = arith.cmpi slt, %25, %33 : vector<64x2xi32>
    %35 = arith.andi %29, %34 : vector<64x2xi1>
    %36 = arith.extui %35 : vector<64x2xi1> to vector<64x2xi32>
    %37 = arith.sitofp %36 : vector<64x2xi32> to vector<64x2xf32>
    %cst_28 = arith.constant 3.125000e-02 : f32
    %38 = vector.broadcast %cst_28 : f32 to vector<64x2xf32>
    %39 = arith.mulf %37, %38 : vector<64x2xf32>
    %40 = tpu.iota {dimensions = array<i32: 0>} : vector<2x64xi32>
    %41 = tpu.iota {dimensions = array<i32: 1>} : vector<2x64xi32>
    %c32_i32_29 = arith.constant 32 : i32
    %42 = vector.broadcast %c32_i32_29 : i32 to vector<2x64xi32>
    %43 = arith.muli %40, %42 : vector<2x64xi32>
    %44 = arith.cmpi sge, %41, %43 : vector<2x64xi32>
    %c32_i32_30 = arith.constant 32 : i32
    %45 = vector.broadcast %c32_i32_30 : i32 to vector<2x64xi32>
    %46 = arith.muli %40, %45 : vector<2x64xi32>
    %c32_i32_31 = arith.constant 32 : i32
    %47 = vector.broadcast %c32_i32_31 : i32 to vector<2x64xi32>
    %48 = arith.addi %46, %47 : vector<2x64xi32>
    %49 = arith.cmpi slt, %41, %48 : vector<2x64xi32>
    %50 = arith.andi %44, %49 : vector<2x64xi1>
    %51 = arith.extui %50 : vector<2x64xi1> to vector<2x64xi32>
    %52 = arith.sitofp %51 : vector<2x64xi32> to vector<2x64xf32>
    %cst_32 = arith.constant dense<0.000000e+00> : vector<16x2xf32>
    %53 = tpu.matmul %24, %39, %cst_32 {dimension_numbers = #tpu.dot_dimension_numbers<[1], [0], [0], [1], [0, 0, 1, 1], [], []>} : vector<16x64xf32>, vector<64x2xf32>, vector<16x2xf32> -> vector<16x2xf32>
    %cst_33 = arith.constant dense<0.000000e+00> : vector<16x64xf32>
    %54 = tpu.matmul %53, %52, %cst_33 {dimension_numbers = #tpu.dot_dimension_numbers<[1], [0], [0], [1], [0, 0, 1, 1], [], []>} : vector<16x2xf32>, vector<2x64xf32>, vector<16x64xf32> -> vector<16x64xf32>
    %55 = arith.subf %24, %54 : vector<16x64xf32>
    %56 = arith.mulf %55, %55 : vector<16x64xf32>
    %cst_34 = arith.constant dense<0.000000e+00> : vector<16x2xf32>
    %57 = tpu.matmul %56, %39, %cst_34 {dimension_numbers = #tpu.dot_dimension_numbers<[1], [0], [0], [1], [0, 0, 1, 1], [], []>} : vector<16x64xf32>, vector<64x2xf32>, vector<16x2xf32> -> vector<16x2xf32>
    %cst_35 = arith.constant dense<0.000000e+00> : vector<16x64xf32>
    %58 = tpu.matmul %57, %52, %cst_35 {dimension_numbers = #tpu.dot_dimension_numbers<[1], [0], [0], [1], [0, 0, 1, 1], [], []>} : vector<16x2xf32>, vector<2x64xf32>, vector<16x64xf32> -> vector<16x64xf32>
    %c0_36 = arith.constant 0 : index
    %c0_37 = arith.constant 0 : index
    %59 = vector.load %arg3[%c0_36, %c0_37] : memref<2x64xf32, #tpu.memory_space<vmem>>, vector<2x64xf32>
    %cst_38 = arith.constant 9.99999974E-6 : f32
    %60 = vector.broadcast %cst_38 : f32 to vector<16x64xf32>
    %61 = arith.addf %58, %60 : vector<16x64xf32>
    %62 = math.rsqrt %61 : vector<16x64xf32>
    %63 = arith.mulf %55, %62 : vector<16x64xf32>
    %64 = vector.extract_strided_slice %59 {offsets = [0, 0], sizes = [1, 64], strides = [1, 1]} : vector<2x64xf32> to vector<1x64xf32>
    %65 = vector.broadcast %64 : vector<1x64xf32> to vector<16x64xf32>
    %66 = arith.mulf %63, %65 : vector<16x64xf32>
    %67 = vector.extract_strided_slice %59 {offsets = [1, 0], sizes = [1, 64], strides = [1, 1]} : vector<2x64xf32> to vector<1x64xf32>
    %68 = vector.broadcast %67 : vector<1x64xf32> to vector<16x64xf32>
    %69 = arith.addf %66, %68 : vector<16x64xf32>
    %cst_39 = arith.constant 0.000000e+00 : f32
    %70 = vector.broadcast %cst_39 : f32 to vector<16x64xf32>
    %71 = arith.maximumf %69, %70 : vector<16x64xf32>
    %72 = vector.extract_strided_slice %71 {offsets = [0, 0], sizes = [8, 64], strides = [1, 1]} : vector<16x64xf32> to vector<8x64xf32>
    %73 = vector.extract_strided_slice %71 {offsets = [8, 0], sizes = [8, 64], strides = [1, 1]} : vector<16x64xf32> to vector<8x64xf32>
    %74 = arith.maximumf %72, %73 : vector<8x64xf32>
    %75 = tpu.iota {dimensions = array<i32: 0>} : vector<64x32xi32>
    %76 = tpu.iota {dimensions = array<i32: 1>} : vector<64x32xi32>
    %c2_i32 = arith.constant 2 : i32
    %77 = vector.broadcast %c2_i32 : i32 to vector<64x32xi32>
    %78 = arith.muli %76, %77 : vector<64x32xi32>
    %c0_i32 = arith.constant 0 : i32
    %79 = vector.broadcast %c0_i32 : i32 to vector<64x32xi32>
    %80 = arith.addi %78, %79 : vector<64x32xi32>
    %81 = arith.cmpi eq, %75, %80 : vector<64x32xi32>
    %82 = arith.extui %81 : vector<64x32xi1> to vector<64x32xi32>
    %83 = arith.sitofp %82 : vector<64x32xi32> to vector<64x32xf32>
    %cst_40 = arith.constant dense<0.000000e+00> : vector<8x32xf32>
    %84 = tpu.matmul %74, %83, %cst_40 {dimension_numbers = #tpu.dot_dimension_numbers<[1], [0], [0], [1], [0, 0, 1, 1], [], []>} : vector<8x64xf32>, vector<64x32xf32>, vector<8x32xf32> -> vector<8x32xf32>
    %c2_i32_41 = arith.constant 2 : i32
    %85 = vector.broadcast %c2_i32_41 : i32 to vector<64x32xi32>
    %86 = arith.muli %76, %85 : vector<64x32xi32>
    %c1_i32 = arith.constant 1 : i32
    %87 = vector.broadcast %c1_i32 : i32 to vector<64x32xi32>
    %88 = arith.addi %86, %87 : vector<64x32xi32>
    %89 = arith.cmpi eq, %75, %88 : vector<64x32xi32>
    %90 = arith.extui %89 : vector<64x32xi1> to vector<64x32xi32>
    %91 = arith.sitofp %90 : vector<64x32xi32> to vector<64x32xf32>
    %cst_42 = arith.constant dense<0.000000e+00> : vector<8x32xf32>
    %92 = tpu.matmul %74, %91, %cst_42 {dimension_numbers = #tpu.dot_dimension_numbers<[1], [0], [0], [1], [0, 0, 1, 1], [], []>} : vector<8x64xf32>, vector<64x32xf32>, vector<8x32xf32> -> vector<8x32xf32>
    %93 = arith.maximumf %84, %92 : vector<8x32xf32>
    %94 = tpu.transpose %93, [1, 0] : vector<8x32xf32> -> vector<32x8xf32>
    %95 = vector.extract_strided_slice %94 {offsets = [0, 0], sizes = [16, 8], strides = [1, 1]} : vector<32x8xf32> to vector<16x8xf32>
    %cst_43 = arith.constant 0.000000e+00 : f32
    %96 = vector.broadcast %cst_43 : f32 to vector<16x1xf32>
    %c0_44 = arith.constant 0 : index
    %c0_45 = arith.constant 0 : index
    %97 = vector.load %arg7[%c0_44, %c0_45] : memref<48x64xf32, #tpu.memory_space<vmem>>, vector<16x1xf32>
    tpu.vector_store %arg7[%c0_44, %c0_45], %96 {strides = array<i32>} : memref<48x64xf32, #tpu.memory_space<vmem>>, vector<16x1xf32>,
    %98 = vector.extract_strided_slice %95 {offsets = [0, 0], sizes = [16, 7], strides = [1, 1]} : vector<16x8xf32> to vector<16x7xf32>
    %c0_46 = arith.constant 0 : index
    %c1_47 = arith.constant 1 : index
    %99 = vector.load %arg7[%c0_46, %c1_47] : memref<48x64xf32, #tpu.memory_space<vmem>>, vector<16x7xf32>
    tpu.vector_store %arg7[%c0_46, %c1_47], %98 {strides = array<i32>} : memref<48x64xf32, #tpu.memory_space<vmem>>, vector<16x7xf32>,
    %c16_48 = arith.constant 16 : index
    %c0_49 = arith.constant 0 : index
    %100 = vector.load %arg7[%c16_48, %c0_49] : memref<48x64xf32, #tpu.memory_space<vmem>>, vector<16x8xf32>
    tpu.vector_store %arg7[%c16_48, %c0_49], %95 {strides = array<i32>} : memref<48x64xf32, #tpu.memory_space<vmem>>, vector<16x8xf32>,
    %cst_50 = arith.constant 0.000000e+00 : f32
    %101 = vector.broadcast %cst_50 : f32 to vector<16x1xf32>
    %c32_51 = arith.constant 32 : index
    %c7 = arith.constant 7 : index
    %102 = vector.load %arg7[%c32_51, %c7] : memref<48x64xf32, #tpu.memory_space<vmem>>, vector<16x1xf32>
    tpu.vector_store %arg7[%c32_51, %c7], %101 {strides = array<i32>} : memref<48x64xf32, #tpu.memory_space<vmem>>, vector<16x1xf32>,
    %103 = vector.extract_strided_slice %95 {offsets = [0, 1], sizes = [16, 7], strides = [1, 1]} : vector<16x8xf32> to vector<16x7xf32>
    %c32_52 = arith.constant 32 : index
    %c0_53 = arith.constant 0 : index
    %104 = vector.load %arg7[%c32_52, %c0_53] : memref<48x64xf32, #tpu.memory_space<vmem>>, vector<16x7xf32>
    tpu.vector_store %arg7[%c32_52, %c0_53], %103 {strides = array<i32>} : memref<48x64xf32, #tpu.memory_space<vmem>>, vector<16x7xf32>,
    %105 = vector.extract_strided_slice %94 {offsets = [16, 0], sizes = [16, 8], strides = [1, 1]} : vector<32x8xf32> to vector<16x8xf32>
    %cst_54 = arith.constant 0.000000e+00 : f32
    %106 = vector.broadcast %cst_54 : f32 to vector<16x1xf32>
    %c0_55 = arith.constant 0 : index
    %c8_56 = arith.constant 8 : index
    %107 = vector.load %arg7[%c0_55, %c8_56] : memref<48x64xf32, #tpu.memory_space<vmem>>, vector<16x1xf32>
    tpu.vector_store %arg7[%c0_55, %c8_56], %106 {strides = array<i32>} : memref<48x64xf32, #tpu.memory_space<vmem>>, vector<16x1xf32>,
    %108 = vector.extract_strided_slice %105 {offsets = [0, 0], sizes = [16, 7], strides = [1, 1]} : vector<16x8xf32> to vector<16x7xf32>
    %c0_57 = arith.constant 0 : index
    %c9 = arith.constant 9 : index
    %109 = vector.load %arg7[%c0_57, %c9] : memref<48x64xf32, #tpu.memory_space<vmem>>, vector<16x7xf32>
    tpu.vector_store %arg7[%c0_57, %c9], %108 {strides = array<i32>} : memref<48x64xf32, #tpu.memory_space<vmem>>, vector<16x7xf32>,
    %c16_58 = arith.constant 16 : index
    %c8_59 = arith.constant 8 : index
    %110 = vector.load %arg7[%c16_58, %c8_59] : memref<48x64xf32, #tpu.memory_space<vmem>>, vector<16x8xf32>
    tpu.vector_store %arg7[%c16_58, %c8_59], %105 {strides = array<i32>} : memref<48x64xf32, #tpu.memory_space<vmem>>, vector<16x8xf32>,
    %cst_60 = arith.constant 0.000000e+00 : f32
    %111 = vector.broadcast %cst_60 : f32 to vector<16x1xf32>
    %c32_61 = arith.constant 32 : index
    %c15 = arith.constant 15 : index
    %112 = vector.load %arg7[%c32_61, %c15] : memref<48x64xf32, #tpu.memory_space<vmem>>, vector<16x1xf32>
    tpu.vector_store %arg7[%c32_61, %c15], %111 {strides = array<i32>} : memref<48x64xf32, #tpu.memory_space<vmem>>, vector<16x1xf32>,
    %113 = vector.extract_strided_slice %105 {offsets = [0, 1], sizes = [16, 7], strides = [1, 1]} : vector<16x8xf32> to vector<16x7xf32>
    %c32_62 = arith.constant 32 : index
    %c8_63 = arith.constant 8 : index
    %114 = vector.load %arg7[%c32_62, %c8_63] : memref<48x64xf32, #tpu.memory_space<vmem>>, vector<16x7xf32>
    tpu.vector_store %arg7[%c32_62, %c8_63], %113 {strides = array<i32>} : memref<48x64xf32, #tpu.memory_space<vmem>>, vector<16x7xf32>,
    %c0_64 = arith.constant 0 : index
    %c0_65 = arith.constant 0 : index
    %115 = vector.load %arg7[%c0_64, %c0_65] : memref<48x64xf32, #tpu.memory_space<vmem>>, vector<48x16xf32>
    %c0_66 = arith.constant 0 : index
    %c0_67 = arith.constant 0 : index
    %116 = vector.load %arg4[%c0_66, %c0_67] : memref<12x48xf32, #tpu.memory_space<vmem>>, vector<12x48xf32>
    %cst_68 = arith.constant dense<0.000000e+00> : vector<12x16xf32>
    %117 = tpu.matmul %116, %115, %cst_68 {dimension_numbers = #tpu.dot_dimension_numbers<[1], [0], [0], [1], [0, 0, 1, 1], [], []>} : vector<12x48xf32>, vector<48x16xf32>, vector<12x16xf32> -> vector<12x16xf32>
    %118 = tpu.iota {dimensions = array<i32: 0>} : vector<16x2xi32>
    %119 = tpu.iota {dimensions = array<i32: 1>} : vector<16x2xi32>
    %c8_i32 = arith.constant 8 : i32
    %120 = vector.broadcast %c8_i32 : i32 to vector<16x2xi32>
    %121 = arith.muli %119, %120 : vector<16x2xi32>
    %122 = arith.cmpi sge, %118, %121 : vector<16x2xi32>
    %c8_i32_69 = arith.constant 8 : i32
    %123 = vector.broadcast %c8_i32_69 : i32 to vector<16x2xi32>
    %124 = arith.muli %119, %123 : vector<16x2xi32>
    %c8_i32_70 = arith.constant 8 : i32
    %125 = vector.broadcast %c8_i32_70 : i32 to vector<16x2xi32>
    %126 = arith.addi %124, %125 : vector<16x2xi32>
    %127 = arith.cmpi slt, %118, %126 : vector<16x2xi32>
    %128 = arith.andi %122, %127 : vector<16x2xi1>
    %129 = arith.extui %128 : vector<16x2xi1> to vector<16x2xi32>
    %130 = arith.sitofp %129 : vector<16x2xi32> to vector<16x2xf32>
    %cst_71 = arith.constant 1.250000e-01 : f32
    %131 = vector.broadcast %cst_71 : f32 to vector<16x2xf32>
    %132 = arith.mulf %130, %131 : vector<16x2xf32>
    %133 = tpu.iota {dimensions = array<i32: 0>} : vector<2x16xi32>
    %134 = tpu.iota {dimensions = array<i32: 1>} : vector<2x16xi32>
    %c8_i32_72 = arith.constant 8 : i32
    %135 = vector.broadcast %c8_i32_72 : i32 to vector<2x16xi32>
    %136 = arith.muli %133, %135 : vector<2x16xi32>
    %137 = arith.cmpi sge, %134, %136 : vector<2x16xi32>
    %c8_i32_73 = arith.constant 8 : i32
    %138 = vector.broadcast %c8_i32_73 : i32 to vector<2x16xi32>
    %139 = arith.muli %133, %138 : vector<2x16xi32>
    %c8_i32_74 = arith.constant 8 : i32
    %140 = vector.broadcast %c8_i32_74 : i32 to vector<2x16xi32>
    %141 = arith.addi %139, %140 : vector<2x16xi32>
    %142 = arith.cmpi slt, %134, %141 : vector<2x16xi32>
    %143 = arith.andi %137, %142 : vector<2x16xi1>
    %144 = arith.extui %143 : vector<2x16xi1> to vector<2x16xi32>
    %145 = arith.sitofp %144 : vector<2x16xi32> to vector<2x16xf32>
    %cst_75 = arith.constant dense<0.000000e+00> : vector<12x2xf32>
    %146 = tpu.matmul %117, %132, %cst_75 {dimension_numbers = #tpu.dot_dimension_numbers<[1], [0], [0], [1], [0, 0, 1, 1], [], []>} : vector<12x16xf32>, vector<16x2xf32>, vector<12x2xf32> -> vector<12x2xf32>
    %cst_76 = arith.constant dense<0.000000e+00> : vector<12x16xf32>
    %147 = tpu.matmul %146, %145, %cst_76 {dimension_numbers = #tpu.dot_dimension_numbers<[1], [0], [0], [1], [0, 0, 1, 1], [], []>} : vector<12x2xf32>, vector<2x16xf32>, vector<12x16xf32> -> vector<12x16xf32>
    %148 = arith.subf %117, %147 : vector<12x16xf32>
    %149 = arith.mulf %148, %148 : vector<12x16xf32>
    %cst_77 = arith.constant dense<0.000000e+00> : vector<12x2xf32>
    %150 = tpu.matmul %149, %132, %cst_77 {dimension_numbers = #tpu.dot_dimension_numbers<[1], [0], [0], [1], [0, 0, 1, 1], [], []>} : vector<12x16xf32>, vector<16x2xf32>, vector<12x2xf32> -> vector<12x2xf32>
    %cst_78 = arith.constant dense<0.000000e+00> : vector<12x16xf32>
    %151 = tpu.matmul %150, %145, %cst_78 {dimension_numbers = #tpu.dot_dimension_numbers<[1], [0], [0], [1], [0, 0, 1, 1], [], []>} : vector<12x2xf32>, vector<2x16xf32>, vector<12x16xf32> -> vector<12x16xf32>
    %c0_79 = arith.constant 0 : index
    %c0_80 = arith.constant 0 : index
    %152 = vector.load %arg5[%c0_79, %c0_80] : memref<2x16xf32, #tpu.memory_space<vmem>>, vector<2x16xf32>
    %cst_81 = arith.constant 9.99999974E-6 : f32
    %153 = vector.broadcast %cst_81 : f32 to vector<12x16xf32>
    %154 = arith.addf %151, %153 : vector<12x16xf32>
    %155 = math.rsqrt %154 : vector<12x16xf32>
    %156 = arith.mulf %148, %155 : vector<12x16xf32>
    %157 = vector.extract_strided_slice %152 {offsets = [0, 0], sizes = [1, 16], strides = [1, 1]} : vector<2x16xf32> to vector<1x16xf32>
    %158 = vector.broadcast %157 : vector<1x16xf32> to vector<12x16xf32>
    %159 = arith.mulf %156, %158 : vector<12x16xf32>
    %160 = vector.extract_strided_slice %152 {offsets = [1, 0], sizes = [1, 16], strides = [1, 1]} : vector<2x16xf32> to vector<1x16xf32>
    %161 = vector.broadcast %160 : vector<1x16xf32> to vector<12x16xf32>
    %162 = arith.addf %159, %161 : vector<12x16xf32>
    %cst_82 = arith.constant 0.000000e+00 : f32
    %163 = vector.broadcast %cst_82 : f32 to vector<12x16xf32>
    %164 = arith.maximumf %162, %163 : vector<12x16xf32>
    %165 = vector.extract_strided_slice %164 {offsets = [0, 0], sizes = [6, 16], strides = [1, 1]} : vector<12x16xf32> to vector<6x16xf32>
    %166 = vector.extract_strided_slice %164 {offsets = [6, 0], sizes = [6, 16], strides = [1, 1]} : vector<12x16xf32> to vector<6x16xf32>
    %167 = arith.maximumf %165, %166 : vector<6x16xf32>
    %168 = tpu.iota {dimensions = array<i32: 0>} : vector<16x8xi32>
    %169 = tpu.iota {dimensions = array<i32: 1>} : vector<16x8xi32>
    %c2_i32_83 = arith.constant 2 : i32
    %170 = vector.broadcast %c2_i32_83 : i32 to vector<16x8xi32>
    %171 = arith.muli %169, %170 : vector<16x8xi32>
    %c0_i32_84 = arith.constant 0 : i32
    %172 = vector.broadcast %c0_i32_84 : i32 to vector<16x8xi32>
    %173 = arith.addi %171, %172 : vector<16x8xi32>
    %174 = arith.cmpi eq, %168, %173 : vector<16x8xi32>
    %175 = arith.extui %174 : vector<16x8xi1> to vector<16x8xi32>
    %176 = arith.sitofp %175 : vector<16x8xi32> to vector<16x8xf32>
    %cst_85 = arith.constant dense<0.000000e+00> : vector<6x8xf32>
    %177 = tpu.matmul %167, %176, %cst_85 {dimension_numbers = #tpu.dot_dimension_numbers<[1], [0], [0], [1], [0, 0, 1, 1], [], []>} : vector<6x16xf32>, vector<16x8xf32>, vector<6x8xf32> -> vector<6x8xf32>
    %c2_i32_86 = arith.constant 2 : i32
    %178 = vector.broadcast %c2_i32_86 : i32 to vector<16x8xi32>
    %179 = arith.muli %169, %178 : vector<16x8xi32>
    %c1_i32_87 = arith.constant 1 : i32
    %180 = vector.broadcast %c1_i32_87 : i32 to vector<16x8xi32>
    %181 = arith.addi %179, %180 : vector<16x8xi32>
    %182 = arith.cmpi eq, %168, %181 : vector<16x8xi32>
    %183 = arith.extui %182 : vector<16x8xi1> to vector<16x8xi32>
    %184 = arith.sitofp %183 : vector<16x8xi32> to vector<16x8xf32>
    %cst_88 = arith.constant dense<0.000000e+00> : vector<6x8xf32>
    %185 = tpu.matmul %167, %184, %cst_88 {dimension_numbers = #tpu.dot_dimension_numbers<[1], [0], [0], [1], [0, 0, 1, 1], [], []>} : vector<6x16xf32>, vector<16x8xf32>, vector<6x8xf32> -> vector<6x8xf32>
    %186 = arith.maximumf %177, %185 : vector<6x8xf32>
    %c0_89 = arith.constant 0 : index
    %c0_90 = arith.constant 0 : index
    %c0_91 = arith.constant 0 : index
    %187 = vector.load %arg6[%c0_89, %c0_90, %c0_91] : memref<1x6x8xf32, #tpu.memory_space<vmem>>, vector<1x6x8xf32>
    %188 = vector.shape_cast %187 : vector<1x6x8xf32> to vector<6x8xf32>
    %189 = vector.shape_cast %186 : vector<6x8xf32> to vector<1x6x8xf32>
    tpu.vector_store %arg6[%c0_89, %c0_90, %c0_91], %189 {strides = array<i32>} : memref<1x6x8xf32, #tpu.memory_space<vmem>>, vector<1x6x8xf32>,
    return
  }
  func.func @transform_0(%arg0: i32) -> (i32, i32, i32) {
    %c0_i32 = arith.constant 0 : i32
    %c0_i32_0 = arith.constant 0 : i32
    %c0_i32_1 = arith.constant 0 : i32
    return %arg0, %c0_i32, %c0_i32_0 : i32, i32, i32
  }
  func.func @transform_1(%arg0: i32) -> (i32, i32) {
    %c0_i32 = arith.constant 0 : i32
    %c0_i32_0 = arith.constant 0 : i32
    %c0_i32_1 = arith.constant 0 : i32
    return %c0_i32, %c0_i32_0 : i32, i32
  }
  func.func @transform_2(%arg0: i32) -> (i32, i32) {
    %c0_i32 = arith.constant 0 : i32
    %c0_i32_0 = arith.constant 0 : i32
    %c0_i32_1 = arith.constant 0 : i32
    return %c0_i32, %c0_i32_0 : i32, i32
  }
  func.func @transform_3(%arg0: i32) -> (i32, i32) {
    %c0_i32 = arith.constant 0 : i32
    %c0_i32_0 = arith.constant 0 : i32
    %c0_i32_1 = arith.constant 0 : i32
    return %c0_i32, %c0_i32_0 : i32, i32
  }
  func.func @transform_4(%arg0: i32) -> (i32, i32) {
    %c0_i32 = arith.constant 0 : i32
    %c0_i32_0 = arith.constant 0 : i32
    %c0_i32_1 = arith.constant 0 : i32
    return %c0_i32, %c0_i32_0 : i32, i32
  }
  func.func @transform_5(%arg0: i32) -> (i32, i32, i32) {
    %c0_i32 = arith.constant 0 : i32
    %c0_i32_0 = arith.constant 0 : i32
    %c0_i32_1 = arith.constant 0 : i32
    return %arg0, %c0_i32, %c0_i32_0 : i32, i32, i32
  }
}

</mosaic_0001>

<llo_original>
// kernel: tpu_custom_call.1
$region0: #{tpu_custom_call.1}
  #allocation0 [shape = 'u32[]', space=smem, size = 0x4, offset = 0x4, fixed_abs, tag = 'smem constant byte address 0x4 - core index']
  #allocation1 [shape = 'u32[144,128]{1,0:T(1,128)}', space=vmem, size = 0x12000, scoped, tag = 'internal scratch']
  #allocation2 [shape = 'f32[48,64]{1,0:T(8,128)}', space=vmem, size = 0x6000, scoped, tag = 'scratch operand']
  %s0 = inlined_call_operand.hbm [shape: f32[2,8,32], index: 0, kind: input, shape index: {}]
  %s1 = inlined_call_operand.hbm [shape: f32[16,24], index: 1, kind: input, shape index: {}]
  %s2 = inlined_call_operand.vmem [shape: f32[2,64], index: 2, kind: input, shape index: {}]
  %s3 = inlined_call_operand.hbm [shape: f32[12,48], index: 3, kind: input, shape index: {}]
  %s4 = inlined_call_operand.vmem [shape: f32[2,16], index: 4, kind: input, shape index: {}]
  %s5 = inlined_call_operand.vmem [shape: f32[1,6,8], index: 5, kind: output, shape index: {}]
  %s6 = sld [smem:[#allocation0]]
  $region42: #{tpu_custom_call.1} parent=0
    _
  %s8 = ssub.s32 1, %s6
  %s9 = scalar_select 0, %s8, %s6
  $region1: #{tpu_custom_call.1} parent=0
    #allocation3 [shape = 'u8[8192]{0}', space=vmem, size = 0x2000, scoped, tag = 'input window, operand 0, single buffered']
    #allocation4 [shape = 's32[1]{0}', space=sflag, size = 0x4, scoped, tag = 'scoped memory for tpu_custom_call.1']
    #allocation5 [shape = 'u8[8192]{0}', space=vmem, size = 0x2000, scoped, tag = 'input window, operand 1, single buffered']
    #allocation6 [shape = 's32[1]{0}', space=sflag, size = 0x4, scoped, tag = 'scoped memory for tpu_custom_call.1']
    #allocation7 [shape = 'u8[8192]{0}', space=vmem, size = 0x2000, scoped, tag = 'input window, operand 3, single buffered']
    %10 = vsyncpa [#allocation4], 0
    %11 = vsyncpa [#allocation6], 0
    // Predicated region
    $region2: #{tpu_custom_call.1} parent=1 // pred_check
      _
    $region3: #{tpu_custom_call.1} parent=1 // pred_check_branch
      %13 = sbr.rel (0) target = $region5
    $region4: #{tpu_custom_call.1} parent=1 // pred_region
      %s15 = ssub.s32 256, 256
      %16 = vsyncadd [#allocation4], %s15
      %s17 = sshll.u32 [#allocation3], 4
      %s18 = int_to_ptr.vmem [resolvable:$true] %s17
      %23 = dma.hbm_to_vmem [thread:$0]  %s0, 256, %s18, [#allocation4], 128, 128, 8
    $region5: #{tpu_custom_call.1} parent=1 // pred_fallthru
      _
    // Predicated region
    $region6: #{tpu_custom_call.1} parent=1 // pred_check
      _
    $region7: #{tpu_custom_call.1} parent=1 // pred_check_branch
      %25 = sbr.rel (0) target = $region9
    $region8: #{tpu_custom_call.1} parent=1 // pred_region
      %s27 = ssub.s32 256, 256
      %28 = vsyncadd [#allocation6], %s27
      %s29 = sshll.u32 [#allocation5], 4
      %s30 = int_to_ptr.vmem [resolvable:$true] %s29
      %35 = dma.hbm_to_vmem [thread:$0]  %s1, 256, %s30, [#allocation6], 128, 128, 8
    $region9: #{tpu_custom_call.1} parent=1 // pred_fallthru
      _
    // Predicated region
    $region10: #{tpu_custom_call.1} parent=1 // pred_check
      _
    $region11: #{tpu_custom_call.1} parent=1 // pred_check_branch
      %37 = sbr.rel (0) target = $region13
    $region12: #{tpu_custom_call.1} parent=1 // pred_region
      _
    $region13: #{tpu_custom_call.1} parent=1 // pred_fallthru
      _
    // Predicated region
    $region14: #{tpu_custom_call.1} parent=1 // pred_check
      _
    $region15: #{tpu_custom_call.1} parent=1 // pred_check_branch
      %39 = sbr.rel (0) target = $region17
    $region16: #{tpu_custom_call.1} parent=1 // pred_region
      %s41 = ssub.s32 256, 256
      %42 = vsyncadd [#allocation6], %s41
      %s43 = sshll.u32 [#allocation7], 4
      %s44 = int_to_ptr.vmem [resolvable:$true] %s43
      %49 = dma.hbm_to_vmem [thread:$0]  %s3, 256, %s44, [#allocation6], 128, 128, 8
    $region17: #{tpu_custom_call.1} parent=1 // pred_fallthru
      _
    // Predicated region
    $region18: #{tpu_custom_call.1} parent=1 // pred_check
      _
    $region19: #{tpu_custom_call.1} parent=1 // pred_check_branch
      %51 = sbr.rel (0) target = $region21
    $region20: #{tpu_custom_call.1} parent=1 // pred_region
      _
    $region21: #{tpu_custom_call.1} parent=1 // pred_fallthru
      _
    // Predicated region
    $region22: #{tpu_custom_call.1} parent=1 // pred_check
      _
    $region23: #{tpu_custom_call.1} parent=1 // pred_check_branch
      %53 = sbr.rel (0) target = $region25
    $region24: #{tpu_custom_call.1} parent=1 // pred_region
      %54 = dma.done [#allocation4], 256
    $region25: #{tpu_custom_call.1} parent=1 // pred_fallthru
      _
    // Predicated region
    $region26: #{tpu_custom_call.1} parent=1 // pred_check
      _
    $region27: #{tpu_custom_call.1} parent=1 // pred_check_branch
      %56 = sbr.rel (0) target = $region29
    $region28: #{tpu_custom_call.1} parent=1 // pred_region
      %57 = dma.done [#allocation6], 256
    $region29: #{tpu_custom_call.1} parent=1 // pred_fallthru
      _
    // Predicated region
    $region30: #{tpu_custom_call.1} parent=1 // pred_check
      _
    $region31: #{tpu_custom_call.1} parent=1 // pred_check_branch
      %59 = sbr.rel (0) target = $region33
    $region32: #{tpu_custom_call.1} parent=1 // pred_region
      %60 = dma.done [#allocation6], 256
    $region33: #{tpu_custom_call.1} parent=1 // pred_fallthru
      _
    %v61 = vld [vmem:[#allocation3] sm:$0xff]
    %vm62 = vcmask 7168
    %63 = vst.msk [vmem:[#allocation2] sm:$0xff] %vm62, 0.0
    %65 = vrot.lane.b32.xlu0 %v61, 1
    %v66 = vpop.permute.xlu0 %65
    %vm68 = vcmask 261128
    %69 = vst.msk [vmem:[#allocation2] sm:$0xff] %vm68, %v66
    %vm70 = vcmask 261120
    %71 = vst.msk [vmem:[#allocation2 + $0x8] sm:$0xff] %vm70, %v61
    %vm72 = vcmask 261368
    %73 = vst.msk [vmem:[#allocation2 + $0x10] sm:$0xff] %vm72, 0.0
    %74 = vrot.lane.b32.xlu0 %v61, 127
    %v75 = vpop.permute.xlu0 %74
    %vm77 = vcmask 252928
    %78 = vst.msk [vmem:[#allocation2 + $0x10] sm:$0xff] %vm77, %v75
    %s79 = scalar_lea.vmem [#allocation3], 8
    %v80 = vld [vmem:[%s79] sm:$0xff]
    %vm81 = vcmask 269568
    %82 = vst.msk [vmem:[#allocation2] sm:$0xff] %vm81, 0.0
    %84 = vrot.lane.b32.xlu0 %v80, 33
    %v85 = vpop.permute.xlu0 %84
    %vm87 = vcmask 523528
    %88 = vst.msk [vmem:[#allocation2] sm:$0xff] %vm87, %v85
    %89 = vrot.lane.b32.xlu0 %v80, 32
    %v90 = vpop.permute.xlu0 %89
    %vm92 = vcmask 523520
    %93 = vst.msk [vmem:[#allocation2 + $0x8] sm:$0xff] %vm92, %v90
    %vm94 = vcmask 523768
    %95 = vst.msk [vmem:[#allocation2 + $0x10] sm:$0xff] %vm94, 0.0
    %96 = vrot.lane.b32.xlu0 %v80, 31
    %v97 = vpop.permute.xlu0 %96
    %vm99 = vcmask 515328
    %100 = vst.msk [vmem:[#allocation2 + $0x10] sm:$0xff] %vm99, %v97
    %v101 = vld [vmem:[#allocation2] sm:$0xff]
    %v102 = vld [vmem:[#allocation2 + $0x8] sm:$0xff]
    %v103 = vld [vmem:[#allocation2 + $0x10] sm:$0xff]
    %v104 = vld [vmem:[#allocation5] sm:$0xff]
    %v105 = vld [vmem:[#allocation5 + $0x8] sm:$0xff]
    %vm106 = vcmask 195584
    %v108 = vsel %vm106, %v104, 0
    %v111 = vsel %vm106, %v105, 0
    %113 = vmatprep.subr.mxu0 0.0
    %114 = vmatpush1.msra.mxu0 %v101
    %115 = vmatprep.subr.mxu0 0.0
    %116 = vmatpush1.msra.mxu0 %v102
    %117 = vmatprep.subr.mxu0 0.0
    %118 = vmatpush1.msra.mxu0 %v103
    %119 = vmatprep.subr.mxu0 0.0
    %120 = vmatpush1.msra.mxu0 0.0
    %121 = vmatprep.subr.mxu0 0.0
    %122 = vmatpush1.msra.mxu0 0.0
    %123 = vmatprep.subr.mxu0 0.0
    %124 = vmatpush1.msra.mxu0 0.0
    %125 = vmatprep.subr.mxu0 0.0
    %126 = vmatpush1.msra.mxu0 0.0
    %127 = vmatprep.subr.mxu0 0.0
    %128 = vmatpush1.msra.mxu0 0.0
    %129 = vmatprep.subr.mxu0 0.0
    %130 = vmatpush1.msra.mxu0 0.0
    %131 = vmatprep.subr.mxu0 0.0
    %132 = vmatpush1.msra.mxu0 0.0
    %133 = vmatprep.subr.mxu0 0.0
    %134 = vmatpush1.msra.mxu0 0.0
    %135 = vmatprep.subr.mxu0 0.0
    %136 = vmatpush1.msra.mxu0 0.0
    %137 = vmatprep.subr.mxu0 0.0
    %138 = vmatpush1.msra.mxu0 0.0
    %139 = vmatprep.subr.mxu0 0.0
    %140 = vmatpush1.msra.mxu0 0.0
    %141 = vmatprep.subr.mxu0 0.0
    %142 = vmatpush1.msra.mxu0 0.0
    %143 = vmatprep.subr.mxu0 0.0
    %144 = vmatpush1.msra.mxu0 0.0
    %145 = vmatprep.subr.mxu0 0.0
    %146 = vmatpush1.msra.mxu0 0.0
    %147 = vmatprep.subr.mxu0 0.0
    %148 = vmatpush1.msra.mxu0 0.0
    %149 = vmatprep.subr.mxu0 0.0
    %150 = vmatpush1.msra.mxu0 0.0
    %151 = vmatprep.subr.mxu0 0.0
    %152 = vmatpush1.msra.mxu0 0.0
    %153 = vmatprep.subr.mxu0 0.0
    %154 = vmatpush1.msra.mxu0 0.0
    %155 = vmatprep.subr.mxu0 0.0
    %156 = vmatpush1.msra.mxu0 0.0
    %157 = vmatprep.subr.mxu0 0.0
    %158 = vmatpush1.msra.mxu0 0.0
    %159 = vmatprep.subr.mxu0 0.0
    %160 = vmatpush1.msra.mxu0 0.0
    %161 = vmatprep.subr.mxu0 0.0
    %162 = vmatpush1.msra.mxu0 0.0
    %163 = vmatprep.subr.mxu0 0.0
    %164 = vmatpush1.msra.mxu0 0.0
    %165 = vmatprep.subr.mxu0 0.0
    %166 = vmatpush1.msra.mxu0 0.0
    %167 = vmatprep.subr.mxu0 0.0
    %168 = vmatpush1.msra.mxu0 0.0
    %169 = vmatprep.subr.mxu0 0.0
    %170 = vmatpush1.msra.mxu0 0.0
    %171 = vmatprep.subr.mxu0 0.0
    %172 = vmatpush1.msra.mxu0 0.0
    %173 = vmatprep.subr.mxu0 0.0
    %174 = vmatpush1.msra.mxu0 0.0
    %175 = vmatprep.subr.mxu0 0.0
    %176 = vmatpush1.msra.mxu0 0.0
    %177 = vmatprep.mubr.f32.mxu0 0.0
    %178 = vmatmul.mubr.f32.gmra.mrb[0].mxu0 %v108
    %v179 = vpop.f32.mrb[0].mxu0
    %v180 = vadd.f32 0.0, %v179
    %v181 = vpop.f32.mrb[0].mxu0
    %182 = vmatprep.mubr.f32.mxu0 0.0
    %183 = vmatmul.mubr.f32.gmra.mrb[0].mxu0 %v111
    %v184 = vpop.f32.mrb[0].mxu0
    %v185 = vadd.f32 0.0, %v184
    %v186 = vpop.f32.mrb[0].mxu0
    %187 = vdwg.mxu0
    %v188 = vlaneseq
    %v189 = vshrl.u32 %v188, 7
    %v190 = vadd.s32 %v189, 8
    %v191 = vadd.s32 %v189, 16
    %v192 = vadd.s32 %v189, 24
    %v193 = vadd.s32 %v189, 32
    %v194 = vadd.s32 %v189, 40
    %v195 = vadd.s32 %v189, 48
    %v196 = vadd.s32 %v189, 56
    %v197 = vlaneseq
    %v198 = vand.u32 %v197, 127
    %v199 = vmul.u32 %v198, 32
    %vm200 = vcmp.ge.s32.totalorder %v189, %v199
    %vm201 = vcmp.ge.s32.totalorder %v190, %v199
    %vm202 = vcmp.ge.s32.totalorder %v191, %v199
    %vm203 = vcmp.ge.s32.totalorder %v192, %v199
    %vm204 = vcmp.ge.s32.totalorder %v193, %v199
    %vm205 = vcmp.ge.s32.totalorder %v194, %v199
    %vm206 = vcmp.ge.s32.totalorder %v195, %v199
    %vm207 = vcmp.ge.s32.totalorder %v196, %v199
    %v208 = vadd.s32 %v199, 32
    %vm209 = vcmp.lt.s32.totalorder %v189, %v208
    %vm210 = vcmp.lt.s32.totalorder %v190, %v208
    %vm211 = vcmp.lt.s32.totalorder %v191, %v208
    %vm212 = vcmp.lt.s32.totalorder %v192, %v208
    %vm213 = vcmp.lt.s32.totalorder %v193, %v208
    %vm214 = vcmp.lt.s32.totalorder %v194, %v208
    %vm215 = vcmp.lt.s32.totalorder %v195, %v208
    %vm216 = vcmp.lt.s32.totalorder %v196, %v208
    %vm217 = vmand %vm200, %vm209
    %vm218 = vmand %vm201, %vm210
    %vm219 = vmand %vm202, %vm211
    %vm220 = vmand %vm203, %vm212
    %vm221 = vmand %vm204, %vm213
    %vm222 = vmand %vm205, %vm214
    %vm223 = vmand %vm206, %vm215
    %vm224 = vmand %vm207, %vm216
    %v225 = vsel %vm217, 1, 0
    %v226 = vsel %vm218, 1, 0
    %v227 = vsel %vm219, 1, 0
    %v228 = vsel %vm220, 1, 0
    %v229 = vsel %vm221, 1, 0
    %v230 = vsel %vm222, 1, 0
    %v231 = vsel %vm223, 1, 0
    %v232 = vsel %vm224, 1, 0
    %v233 = vcvt.s32.f32 %v225
    %v234 = vcvt.s32.f32 %v226
    %v235 = vcvt.s32.f32 %v227
    %v236 = vcvt.s32.f32 %v228
    %v237 = vcvt.s32.f32 %v229
    %v238 = vcvt.s32.f32 %v230
    %v239 = vcvt.s32.f32 %v231
    %v240 = vcvt.s32.f32 %v232
    %v241 = vmul.f32 %v233, 0.03125
    %v242 = vmul.f32 %v234, 0.03125
    %v243 = vmul.f32 %v235, 0.03125
    %v244 = vmul.f32 %v236, 0.03125
    %v245 = vmul.f32 %v237, 0.03125
    %v246 = vmul.f32 %v238, 0.03125
    %v247 = vmul.f32 %v239, 0.03125
    %v248 = vmul.f32 %v240, 0.03125
    %v249 = vmul.u32 %v189, 32
    %vm250 = vcmp.ge.s32.totalorder %v198, %v249
    %v251 = vadd.s32 %v249, 32
    %vm252 = vcmp.lt.s32.totalorder %v198, %v251
    %vm253 = vmand %vm250, %vm252
    %v254 = vsel %vm253, 1, 0
    %v255 = vcvt.s32.f32 %v254
    %vm256 = vcmask 523264
    %v258 = vsel %vm256, %v180, 0
    %v261 = vsel %vm256, %v185, 0
    %263 = vmatprep.subr.mxu0 0.0
    %264 = vmatpush1.msra.mxu0 %v241
    %265 = vmatprep.subr.mxu0 0.0
    %266 = vmatpush1.msra.mxu0 %v242
    %267 = vmatprep.subr.mxu0 0.0
    %268 = vmatpush1.msra.mxu0 %v243
    %269 = vmatprep.subr.mxu0 0.0
    %270 = vmatpush1.msra.mxu0 %v244
    %271 = vmatprep.subr.mxu0 0.0
    %272 = vmatpush1.msra.mxu0 %v245
    %273 = vmatprep.subr.mxu0 0.0
    %274 = vmatpush1.msra.mxu0 %v246
    %275 = vmatprep.subr.mxu0 0.0
    %276 = vmatpush1.msra.mxu0 %v247
    %277 = vmatprep.subr.mxu0 0.0
    %278 = vmatpush1.msra.mxu0 %v248
    %279 = vmatprep.subr.mxu0 0.0
    %280 = vmatpush1.msra.mxu0 0.0
    %281 = vmatprep.subr.mxu0 0.0
    %282 = vmatpush1.msra.mxu0 0.0
    %283 = vmatprep.subr.mxu0 0.0
    %284 = vmatpush1.msra.mxu0 0.0
    %285 = vmatprep.subr.mxu0 0.0
    %286 = vmatpush1.msra.mxu0 0.0
    %287 = vmatprep.subr.mxu0 0.0
    %288 = vmatpush1.msra.mxu0 0.0
    %289 = vmatprep.subr.mxu0 0.0
    %290 = vmatpush1.msra.mxu0 0.0
    %291 = vmatprep.subr.mxu0 0.0
    %292 = vmatpush1.msra.mxu0 0.0
    %293 = vmatprep.subr.mxu0 0.0
    %294 = vmatpush1.msra.mxu0 0.0
    %295 = vmatprep.subr.mxu0 0.0
    %296 = vmatpush1.msra.mxu0 0.0
    %297 = vmatprep.subr.mxu0 0.0
    %298 = vmatpush1.msra.mxu0 0.0
    %299 = vmatprep.subr.mxu0 0.0
    %300 = vmatpush1.msra.mxu0 0.0
    %301 = vmatprep.subr.mxu0 0.0
    %302 = vmatpush1.msra.mxu0 0.0
    %303 = vmatprep.subr.mxu0 0.0
    %304 = vmatpush1.msra.mxu0 0.0
    %305 = vmatprep.subr.mxu0 0.0
    %306 = vmatpush1.msra.mxu0 0.0
    %307 = vmatprep.subr.mxu0 0.0
    %308 = vmatpush1.msra.mxu0 0.0
    %309 = vmatprep.subr.mxu0 0.0
    %310 = vmatpush1.msra.mxu0 0.0
    %311 = vmatprep.subr.mxu0 0.0
    %312 = vmatpush1.msra.mxu0 0.0
    %313 = vmatprep.subr.mxu0 0.0
    %314 = vmatpush1.msra.mxu0 0.0
    %315 = vmatprep.subr.mxu0 0.0
    %316 = vmatpush1.msra.mxu0 0.0
    %317 = vmatprep.subr.mxu0 0.0
    %318 = vmatpush1.msra.mxu0 0.0
    %319 = vmatprep.subr.mxu0 0.0
    %320 = vmatpush1.msra.mxu0 0.0
    %321 = vmatprep.subr.mxu0 0.0
    %322 = vmatpush1.msra.mxu0 0.0
    %323 = vmatprep.subr.mxu0 0.0
    %324 = vmatpush1.msra.mxu0 0.0
    %325 = vmatprep.subr.mxu0 0.0
    %326 = vmatpush1.msra.mxu0 0.0
    %327 = vmatprep.mubr.f32.mxu0 0.0
    %328 = vmatmul.mubr.f32.gmra.mrb[0].mxu0 %v258
    %v329 = vpop.f32.mrb[0].mxu0
    %v330 = vadd.f32 0.0, %v329
    %v331 = vpop.f32.mrb[0].mxu0
    %332 = vmatprep.mubr.f32.mxu0 0.0
    %333 = vmatmul.mubr.f32.gmra.mrb[0].mxu0 %v261
    %v334 = vpop.f32.mrb[0].mxu0
    %v335 = vadd.f32 0.0, %v334
    %v336 = vpop.f32.mrb[0].mxu0
    %337 = vdwg.mxu0
    %vm338 = vcmask 15360
    %v340 = vsel %vm338, %v330, 0
    %v343 = vsel %vm338, %v335, 0
    %vm345 = vcmask 1041408
    %v347 = vsel %vm345, %v255, 0
    %349 = vmatprep.subr.mxu0 0.0
    %350 = vmatpush1.msra.mxu0 %v347
    %351 = vmatprep.subr.mxu0 0.0
    %352 = vmatpush1.msra.mxu0 0.0
    %353 = vmatprep.subr.mxu0 0.0
    %354 = vmatpush1.msra.mxu0 0.0
    %355 = vmatprep.subr.mxu0 0.0
    %356 = vmatpush1.msra.mxu0 0.0
    %357 = vmatprep.subr.mxu0 0.0
    %358 = vmatpush1.msra.mxu0 0.0
    %359 = vmatprep.subr.mxu0 0.0
    %360 = vmatpush1.msra.mxu0 0.0
    %361 = vmatprep.subr.mxu0 0.0
    %362 = vmatpush1.msra.mxu0 0.0
    %363 = vmatprep.subr.mxu0 0.0
    %364 = vmatpush1.msra.mxu0 0.0
    %365 = vmatprep.subr.mxu0 0.0
    %366 = vmatpush1.msra.mxu0 0.0
    %367 = vmatprep.subr.mxu0 0.0
    %368 = vmatpush1.msra.mxu0 0.0
    %369 = vmatprep.subr.mxu0 0.0
    %370 = vmatpush1.msra.mxu0 0.0
    %371 = vmatprep.subr.mxu0 0.0
    %372 = vmatpush1.msra.mxu0 0.0
    %373 = vmatprep.subr.mxu0 0.0
    %374 = vmatpush1.msra.mxu0 0.0
    %375 = vmatprep.subr.mxu0 0.0
    %376 = vmatpush1.msra.mxu0 0.0
    %377 = vmatprep.subr.mxu0 0.0
    %378 = vmatpush1.msra.mxu0 0.0
    %379 = vmatprep.subr.mxu0 0.0
    %380 = vmatpush1.msra.mxu0 0.0
    %381 = vmatprep.subr.mxu0 0.0
    %382 = vmatpush1.msra.mxu0 0.0
    %383 = vmatprep.subr.mxu0 0.0
    %384 = vmatpush1.msra.mxu0 0.0
    %385 = vmatprep.subr.mxu0 0.0
    %386 = vmatpush1.msra.mxu0 0.0
    %387 = vmatprep.subr.mxu0 0.0
    %388 = vmatpush1.msra.mxu0 0.0
    %389 = vmatprep.subr.mxu0 0.0
    %390 = vmatpush1.msra.mxu0 0.0
    %391 = vmatprep.subr.mxu0 0.0
    %392 = vmatpush1.msra.mxu0 0.0
    %393 = vmatprep.subr.mxu0 0.0
    %394 = vmatpush1.msra.mxu0 0.0
    %395 = vmatprep.subr.mxu0 0.0
    %396 = vmatpush1.msra.mxu0 0.0
    %397 = vmatprep.subr.mxu0 0.0
    %398 = vmatpush1.msra.mxu0 0.0
    %399 = vmatprep.subr.mxu0 0.0
    %400 = vmatpush1.msra.mxu0 0.0
    %401 = vmatprep.subr.mxu0 0.0
    %402 = vmatpush1.msra.mxu0 0.0
    %403 = vmatprep.subr.mxu0 0.0
    %404 = vmatpush1.msra.mxu0 0.0
    %405 = vmatprep.subr.mxu0 0.0
    %406 = vmatpush1.msra.mxu0 0.0
    %407 = vmatprep.subr.mxu0 0.0
    %408 = vmatpush1.msra.mxu0 0.0
    %409 = vmatprep.subr.mxu0 0.0
    %410 = vmatpush1.msra.mxu0 0.0
    %411 = vmatprep.subr.mxu0 0.0
    %412 = vmatpush1.msra.mxu0 0.0
    %413 = vmatprep.mubr.f32.mxu0 0.0
    %414 = vmatmul.mubr.f32.gmra.mrb[0].mxu0 %v340
    %v415 = vpop.f32.mrb[0].mxu0
    %v416 = vadd.f32 0.0, %v415
    %v417 = vpop.f32.mrb[0].mxu0
    %418 = vmatprep.mubr.f32.mxu0 0.0
    %419 = vmatmul.mubr.f32.gmra.mrb[0].mxu0 %v343
    %v420 = vpop.f32.mrb[0].mxu0
    %v421 = vadd.f32 0.0, %v420
    %v422 = vpop.f32.mrb[0].mxu0
    %423 = vdwg.mxu0
    %v424 = vsub.f32 %v180, %v416
    %v425 = vsub.f32 %v185, %v421
    %v426 = vmul.f32 %v424, %v424
    %v427 = vmul.f32 %v425, %v425
    %v429 = vsel %vm256, %v426, 0
    %v432 = vsel %vm256, %v427, 0
    %434 = vmatprep.subr.mxu0 0.0
    %435 = vmatpush1.msra.mxu0 %v241
    %436 = vmatprep.subr.mxu0 0.0
    %437 = vmatpush1.msra.mxu0 %v242
    %438 = vmatprep.subr.mxu0 0.0
    %439 = vmatpush1.msra.mxu0 %v243
    %440 = vmatprep.subr.mxu0 0.0
    %441 = vmatpush1.msra.mxu0 %v244
    %442 = vmatprep.subr.mxu0 0.0
    %443 = vmatpush1.msra.mxu0 %v245
    %444 = vmatprep.subr.mxu0 0.0
    %445 = vmatpush1.msra.mxu0 %v246
    %446 = vmatprep.subr.mxu0 0.0
    %447 = vmatpush1.msra.mxu0 %v247
    %448 = vmatprep.subr.mxu0 0.0
    %449 = vmatpush1.msra.mxu0 %v248
    %450 = vmatprep.subr.mxu0 0.0
    %451 = vmatpush1.msra.mxu0 0.0
    %452 = vmatprep.subr.mxu0 0.0
    %453 = vmatpush1.msra.mxu0 0.0
    %454 = vmatprep.subr.mxu0 0.0
    %455 = vmatpush1.msra.mxu0 0.0
    %456 = vmatprep.subr.mxu0 0.0
    %457 = vmatpush1.msra.mxu0 0.0
    %458 = vmatprep.subr.mxu0 0.0
    %459 = vmatpush1.msra.mxu0 0.0
    %460 = vmatprep.subr.mxu0 0.0
    %461 = vmatpush1.msra.mxu0 0.0
    %462 = vmatprep.subr.mxu0 0.0
    %463 = vmatpush1.msra.mxu0 0.0
    %464 = vmatprep.subr.mxu0 0.0
    %465 = vmatpush1.msra.mxu0 0.0
    %466 = vmatprep.subr.mxu0 0.0
    %467 = vmatpush1.msra.mxu0 0.0
    %468 = vmatprep.subr.mxu0 0.0
    %469 = vmatpush1.msra.mxu0 0.0
    %470 = vmatprep.subr.mxu0 0.0
    %471 = vmatpush1.msra.mxu0 0.0
    %472 = vmatprep.subr.mxu0 0.0
    %473 = vmatpush1.msra.mxu0 0.0
    %474 = vmatprep.subr.mxu0 0.0
    %475 = vmatpush1.msra.mxu0 0.0
    %476 = vmatprep.subr.mxu0 0.0
    %477 = vmatpush1.msra.mxu0 0.0
    %478 = vmatprep.subr.mxu0 0.0
    %479 = vmatpush1.msra.mxu0 0.0
    %480 = vmatprep.subr.mxu0 0.0
    %481 = vmatpush1.msra.mxu0 0.0
    %482 = vmatprep.subr.mxu0 0.0
    %483 = vmatpush1.msra.mxu0 0.0
    %484 = vmatprep.subr.mxu0 0.0
    %485 = vmatpush1.msra.mxu0 0.0
    %486 = vmatprep.subr.mxu0 0.0
    %487 = vmatpush1.msra.mxu0 0.0
    %488 = vmatprep.subr.mxu0 0.0
    %489 = vmatpush1.msra.mxu0 0.0
    %490 = vmatprep.subr.mxu0 0.0
    %491 = vmatpush1.msra.mxu0 0.0
    %492 = vmatprep.subr.mxu0 0.0
    %493 = vmatpush1.msra.mxu0 0.0
    %494 = vmatprep.subr.mxu0 0.0
    %495 = vmatpush1.msra.mxu0 0.0
    %496 = vmatprep.subr.mxu0 0.0
    %497 = vmatpush1.msra.mxu0 0.0
    %498 = vmatprep.mubr.f32.mxu0 0.0
    %499 = vmatmul.mubr.f32.gmra.mrb[0].mxu0 %v429
    %v500 = vpop.f32.mrb[0].mxu0
    %v501 = vadd.f32 0.0, %v500
    %v502 = vpop.f32.mrb[0].mxu0
    %503 = vmatprep.mubr.f32.mxu0 0.0
    %504 = vmatmul.mubr.f32.gmra.mrb[0].mxu0 %v432
    %v505 = vpop.f32.mrb[0].mxu0
    %v506 = vadd.f32 0.0, %v505
    %v507 = vpop.f32.mrb[0].mxu0
    %508 = vdwg.mxu0
    %v509 = vld [vmem:[%s2] sm:$0x3]
    %v511 = vsel %vm338, %v501, 0
    %v514 = vsel %vm338, %v506, 0
    %516 = vmatprep.subr.mxu0 0.0
    %517 = vmatpush1.msra.mxu0 %v347
    %518 = vmatprep.subr.mxu0 0.0
    %519 = vmatpush1.msra.mxu0 0.0
    %520 = vmatprep.subr.mxu0 0.0
    %521 = vmatpush1.msra.mxu0 0.0
    %522 = vmatprep.subr.mxu0 0.0
    %523 = vmatpush1.msra.mxu0 0.0
    %524 = vmatprep.subr.mxu0 0.0
    %525 = vmatpush1.msra.mxu0 0.0
    %526 = vmatprep.subr.mxu0 0.0
    %527 = vmatpush1.msra.mxu0 0.0
    %528 = vmatprep.subr.mxu0 0.0
    %529 = vmatpush1.msra.mxu0 0.0
    %530 = vmatprep.subr.mxu0 0.0
    %531 = vmatpush1.msra.mxu0 0.0
    %532 = vmatprep.subr.mxu0 0.0
    %533 = vmatpush1.msra.mxu0 0.0
    %534 = vmatprep.subr.mxu0 0.0
    %535 = vmatpush1.msra.mxu0 0.0
    %536 = vmatprep.subr.mxu0 0.0
    %537 = vmatpush1.msra.mxu0 0.0
    %538 = vmatprep.subr.mxu0 0.0
    %539 = vmatpush1.msra.mxu0 0.0
    %540 = vmatprep.subr.mxu0 0.0
    %541 = vmatpush1.msra.mxu0 0.0
    %542 = vmatprep.subr.mxu0 0.0
    %543 = vmatpush1.msra.mxu0 0.0
    %544 = vmatprep.subr.mxu0 0.0
    %545 = vmatpush1.msra.mxu0 0.0
    %546 = vmatprep.subr.mxu0 0.0
    %547 = vmatpush1.msra.mxu0 0.0
    %548 = vmatprep.subr.mxu0 0.0
    %549 = vmatpush1.msra.mxu0 0.0
    %550 = vmatprep.subr.mxu0 0.0
    %551 = vmatpush1.msra.mxu0 0.0
    %552 = vmatprep.subr.mxu0 0.0
    %553 = vmatpush1.msra.mxu0 0.0
    %554 = vmatprep.subr.mxu0 0.0
    %555 = vmatpush1.msra.mxu0 0.0
    %556 = vmatprep.subr.mxu0 0.0
    %557 = vmatpush1.msra.mxu0 0.0
    %558 = vmatprep.subr.mxu0 0.0
    %559 = vmatpush1.msra.mxu0 0.0
    %560 = vmatprep.subr.mxu0 0.0
    %561 = vmatpush1.msra.mxu0 0.0
    %562 = vmatprep.subr.mxu0 0.0
    %563 = vmatpush1.msra.mxu0 0.0
    %564 = vmatprep.subr.mxu0 0.0
    %565 = vmatpush1.msra.mxu0 0.0
    %566 = vmatprep.subr.mxu0 0.0
    %567 = vmatpush1.msra.mxu0 0.0
    %568 = vmatprep.subr.mxu0 0.0
    %569 = vmatpush1.msra.mxu0 0.0
    %570 = vmatprep.subr.mxu0 0.0
    %571 = vmatpush1.msra.mxu0 0.0
    %572 = vmatprep.subr.mxu0 0.0
    %573 = vmatpush1.msra.mxu0 0.0
    %574 = vmatprep.subr.mxu0 0.0
    %575 = vmatpush1.msra.mxu0 0.0
    %576 = vmatprep.subr.mxu0 0.0
    %577 = vmatpush1.msra.mxu0 0.0
    %578 = vmatprep.subr.mxu0 0.0
    %579 = vmatpush1.msra.mxu0 0.0
    %580 = vmatprep.mubr.f32.mxu0 0.0
    %581 = vmatmul.mubr.f32.gmra.mrb[0].mxu0 %v511
    %v582 = vpop.f32.mrb[0].mxu0
    %v583 = vadd.f32 1e-05, %v582
    %v584 = vpop.f32.mrb[0].mxu0
    %585 = vmatprep.mubr.f32.mxu0 0.0
    %586 = vmatmul.mubr.f32.gmra.mrb[0].mxu0 %v514
    %v587 = vpop.f32.mrb[0].mxu0
    %v588 = vadd.f32 1e-05, %v587
    %v589 = vpop.f32.mrb[0].mxu0
    %590 = vdwg.mxu0
    %v591 = vrsqrt.pop %v583
    %v592 = vrsqrt.pop %v588
    %v593 = vmul.f32 %v424, %v591
    %v594 = vmul.f32 %v425, %v592
    %v595 = vlaneseq
    %v596 = vshrl.u32 %v595, 7
    %v597 = vsub.s32 0, %v596
    %v598 = vrot.slane %v509, %v597
    %v599 = vmul.f32 %v593, %v598
    %v600 = vmul.f32 %v594, %v598
    %v601 = vlaneseq
    %v602 = vshrl.u32 %v601, 7
    %v603 = vsub.s32 1, %v602
    %v604 = vrot.slane %v509, %v603
    %v605 = vadd.f32 %v599, %v604
    %v606 = vadd.f32 %v600, %v604
    %v607 = vmax.f32 %v605, 0.0
    %v608 = vmax.f32 %v606, 0.0
    %v609 = vmax.f32 %v607, %v608
    %v610 = vmul.u32 %v198, 2
    %vm611 = vcmp.eq.s32.totalorder %v189, %v610
    %vm612 = vcmp.eq.s32.totalorder %v190, %v610
    %vm613 = vcmp.eq.s32.totalorder %v191, %v610
    %vm614 = vcmp.eq.s32.totalorder %v192, %v610
    %vm615 = vcmp.eq.s32.totalorder %v193, %v610
    %vm616 = vcmp.eq.s32.totalorder %v194, %v610
    %vm617 = vcmp.eq.s32.totalorder %v195, %v610
    %vm618 = vcmp.eq.s32.totalorder %v196, %v610
    %v619 = vsel %vm611, 1, 0
    %v620 = vsel %vm612, 1, 0
    %v621 = vsel %vm613, 1, 0
    %v622 = vsel %vm614, 1, 0
    %v623 = vsel %vm615, 1, 0
    %v624 = vsel %vm616, 1, 0
    %v625 = vsel %vm617, 1, 0
    %v626 = vsel %vm618, 1, 0
    %v627 = vcvt.s32.f32 %v619
    %v628 = vcvt.s32.f32 %v620
    %v629 = vcvt.s32.f32 %v621
    %v630 = vcvt.s32.f32 %v622
    %v631 = vcvt.s32.f32 %v623
    %v632 = vcvt.s32.f32 %v624
    %v633 = vcvt.s32.f32 %v625
    %v634 = vcvt.s32.f32 %v626
    %v636 = vsel %vm256, %v609, 0
    %638 = vmatprep.subr.mxu0 0.0
    %639 = vmatpush1.msra.mxu0 %v627
    %640 = vmatprep.subr.mxu0 0.0
    %641 = vmatpush1.msra.mxu0 %v628
    %642 = vmatprep.subr.mxu0 0.0
    %643 = vmatpush1.msra.mxu0 %v629
    %644 = vmatprep.subr.mxu0 0.0
    %645 = vmatpush1.msra.mxu0 %v630
    %646 = vmatprep.subr.mxu0 0.0
    %647 = vmatpush1.msra.mxu0 %v631
    %648 = vmatprep.subr.mxu0 0.0
    %649 = vmatpush1.msra.mxu0 %v632
    %650 = vmatprep.subr.mxu0 0.0
    %651 = vmatpush1.msra.mxu0 %v633
    %652 = vmatprep.subr.mxu0 0.0
    %653 = vmatpush1.msra.mxu0 %v634
    %654 = vmatprep.subr.mxu0 0.0
    %655 = vmatpush1.msra.mxu0 0.0
    %656 = vmatprep.subr.mxu0 0.0
    %657 = vmatpush1.msra.mxu0 0.0
    %658 = vmatprep.subr.mxu0 0.0
    %659 = vmatpush1.msra.mxu0 0.0
    %660 = vmatprep.subr.mxu0 0.0
    %661 = vmatpush1.msra.mxu0 0.0
    %662 = vmatprep.subr.mxu0 0.0
    %663 = vmatpush1.msra.mxu0 0.0
    %664 = vmatprep.subr.mxu0 0.0
    %665 = vmatpush1.msra.mxu0 0.0
    %666 = vmatprep.subr.mxu0 0.0
    %667 = vmatpush1.msra.mxu0 0.0
    %668 = vmatprep.subr.mxu0 0.0
    %669 = vmatpush1.msra.mxu0 0.0
    %670 = vmatprep.subr.mxu0 0.0
    %671 = vmatpush1.msra.mxu0 0.0
    %672 = vmatprep.subr.mxu0 0.0
    %673 = vmatpush1.msra.mxu0 0.0
    %674 = vmatprep.subr.mxu0 0.0
    %675 = vmatpush1.msra.mxu0 0.0
    %676 = vmatprep.subr.mxu0 0.0
    %677 = vmatpush1.msra.mxu0 0.0
    %678 = vmatprep.subr.mxu0 0.0
    %679 = vmatpush1.msra.mxu0 0.0
    %680 = vmatprep.subr.mxu0 0.0
    %681 = vmatpush1.msra.mxu0 0.0
    %682 = vmatprep.subr.mxu0 0.0
    %683 = vmatpush1.msra.mxu0 0.0
    %684 = vmatprep.subr.mxu0 0.0
    %685 = vmatpush1.msra.mxu0 0.0
    %686 = vmatprep.subr.mxu0 0.0
    %687 = vmatpush1.msra.mxu0 0.0
    %688 = vmatprep.subr.mxu0 0.0
    %689 = vmatpush1.msra.mxu0 0.0
    %690 = vmatprep.subr.mxu0 0.0
    %691 = vmatpush1.msra.mxu0 0.0
    %692 = vmatprep.subr.mxu0 0.0
    %693 = vmatpush1.msra.mxu0 0.0
    %694 = vmatprep.subr.mxu0 0.0
    %695 = vmatpush1.msra.mxu0 0.0
    %696 = vmatprep.subr.mxu0 0.0
    %697 = vmatpush1.msra.mxu0 0.0
    %698 = vmatprep.subr.mxu0 0.0
    %699 = vmatpush1.msra.mxu0 0.0
    %700 = vmatprep.subr.mxu0 0.0
    %701 = vmatpush1.msra.mxu0 0.0
    %702 = vmatprep.mubr.f32.mxu0 0.0
    %703 = vmatmul.mubr.f32.gmra.mrb[0].mxu0 %v636
    %v704 = vpop.f32.mrb[0].mxu0
    %v705 = vadd.f32 0.0, %v704
    %v706 = vpop.f32.mrb[0].mxu0
    %707 = vdwg.mxu0
    %v708 = vadd.s32 %v610, 1
    %vm709 = vcmp.eq.s32.totalorder %v189, %v708
    %vm710 = vcmp.eq.s32.totalorder %v190, %v708
    %vm711 = vcmp.eq.s32.totalorder %v191, %v708
    %vm712 = vcmp.eq.s32.totalorder %v192, %v708
    %vm713 = vcmp.eq.s32.totalorder %v193, %v708
    %vm714 = vcmp.eq.s32.totalorder %v194, %v708
    %vm715 = vcmp.eq.s32.totalorder %v195, %v708
    %vm716 = vcmp.eq.s32.totalorder %v196, %v708
    %v717 = vsel %vm709, 1, 0
    %v718 = vsel %vm710, 1, 0
    %v719 = vsel %vm711, 1, 0
    %v720 = vsel %vm712, 1, 0
    %v721 = vsel %vm713, 1, 0
    %v722 = vsel %vm714, 1, 0
    %v723 = vsel %vm715, 1, 0
    %v724 = vsel %vm716, 1, 0
    %v725 = vcvt.s32.f32 %v717
    %v726 = vcvt.s32.f32 %v718
    %v727 = vcvt.s32.f32 %v719
    %v728 = vcvt.s32.f32 %v720
    %v729 = vcvt.s32.f32 %v721
    %v730 = vcvt.s32.f32 %v722
    %v731 = vcvt.s32.f32 %v723
    %v732 = vcvt.s32.f32 %v724
    %733 = vmatprep.subr.mxu0 0.0
    %734 = vmatpush1.msra.mxu0 %v725
    %735 = vmatprep.subr.mxu0 0.0
    %736 = vmatpush1.msra.mxu0 %v726
    %737 = vmatprep.subr.mxu0 0.0
    %738 = vmatpush1.msra.mxu0 %v727
    %739 = vmatprep.subr.mxu0 0.0
    %740 = vmatpush1.msra.mxu0 %v728
    %741 = vmatprep.subr.mxu0 0.0
    %742 = vmatpush1.msra.mxu0 %v729
    %743 = vmatprep.subr.mxu0 0.0
    %744 = vmatpush1.msra.mxu0 %v730
    %745 = vmatprep.subr.mxu0 0.0
    %746 = vmatpush1.msra.mxu0 %v731
    %747 = vmatprep.subr.mxu0 0.0
    %748 = vmatpush1.msra.mxu0 %v732
    %749 = vmatprep.subr.mxu0 0.0
    %750 = vmatpush1.msra.mxu0 0.0
    %751 = vmatprep.subr.mxu0 0.0
    %752 = vmatpush1.msra.mxu0 0.0
    %753 = vmatprep.subr.mxu0 0.0
    %754 = vmatpush1.msra.mxu0 0.0
    %755 = vmatprep.subr.mxu0 0.0
    %756 = vmatpush1.msra.mxu0 0.0
    %757 = vmatprep.subr.mxu0 0.0
    %758 = vmatpush1.msra.mxu0 0.0
    %759 = vmatprep.subr.mxu0 0.0
    %760 = vmatpush1.msra.mxu0 0.0
    %761 = vmatprep.subr.mxu0 0.0
    %762 = vmatpush1.msra.mxu0 0.0
    %763 = vmatprep.subr.mxu0 0.0
    %764 = vmatpush1.msra.mxu0 0.0
    %765 = vmatprep.subr.mxu0 0.0
    %766 = vmatpush1.msra.mxu0 0.0
    %767 = vmatprep.subr.mxu0 0.0
    %768 = vmatpush1.msra.mxu0 0.0
    %769 = vmatprep.subr.mxu0 0.0
    %770 = vmatpush1.msra.mxu0 0.0
    %771 = vmatprep.subr.mxu0 0.0
    %772 = vmatpush1.msra.mxu0 0.0
    %773 = vmatprep.subr.mxu0 0.0
    %774 = vmatpush1.msra.mxu0 0.0
    %775 = vmatprep.subr.mxu0 0.0
    %776 = vmatpush1.msra.mxu0 0.0
    %777 = vmatprep.subr.mxu0 0.0
    %778 = vmatpush1.msra.mxu0 0.0
    %779 = vmatprep.subr.mxu0 0.0
    %780 = vmatpush1.msra.mxu0 0.0
    %781 = vmatprep.subr.mxu0 0.0
    %782 = vmatpush1.msra.mxu0 0.0
    %783 = vmatprep.subr.mxu0 0.0
    %784 = vmatpush1.msra.mxu0 0.0
    %785 = vmatprep.subr.mxu0 0.0
    %786 = vmatpush1.msra.mxu0 0.0
    %787 = vmatprep.subr.mxu0 0.0
    %788 = vmatpush1.msra.mxu0 0.0
    %789 = vmatprep.subr.mxu0 0.0
    %790 = vmatpush1.msra.mxu0 0.0
    %791 = vmatprep.subr.mxu0 0.0
    %792 = vmatpush1.msra.mxu0 0.0
    %793 = vmatprep.subr.mxu0 0.0
    %794 = vmatpush1.msra.mxu0 0.0
    %795 = vmatprep.subr.mxu0 0.0
    %796 = vmatpush1.msra.mxu0 0.0
    %797 = vmatprep.mubr.f32.mxu0 0.0
    %798 = vmatmul.mubr.f32.gmra.mrb[0].mxu0 %v636
    %v799 = vpop.f32.mrb[0].mxu0
    %v800 = vadd.f32 0.0, %v799
    %v801 = vpop.f32.mrb[0].mxu0
    %802 = vdwg.mxu0
    %v803 = vmax.f32 %v705, %v800
    %804 = vxpose.xlu0.b32.start [1/16] %v803, 128
    %805 = vxpose.xlu0.b32.cont [2/16] 0.0, 128
    %806 = vxpose.xlu0.b32.cont [3/16] 0.0, 128
    %807 = vxpose.xlu0.b32.cont [4/16] 0.0, 128
    %808 = vxpose.xlu0.b32.cont [5/16] 0.0, 128
    %809 = vxpose.xlu0.b32.cont [6/16] 0.0, 128
    %810 = vxpose.xlu0.b32.cont [7/16] 0.0, 128
    %811 = vxpose.xlu0.b32.cont [8/16] 0.0, 128
    %812 = vxpose.xlu0.b32.cont [9/16] 0.0, 128
    %813 = vxpose.xlu0.b32.cont [10/16] 0.0, 128
    %814 = vxpose.xlu0.b32.cont [11/16] 0.0, 128
    %815 = vxpose.xlu0.b32.cont [12/16] 0.0, 128
    %816 = vxpose.xlu0.b32.cont [13/16] 0.0, 128
    %817 = vxpose.xlu0.b32.cont [14/16] 0.0, 128
    %818 = vxpose.xlu0.b32.cont [15/16] 0.0, 128
    %819 = vxpose.xlu0.b32.end [16/16] 0.0, 128
    %v820 = vpop.trf.xlu0
    %v821 = vpop.trf.xlu0
    %v822 = vpop.trf.xlu0
    %v823 = vpop.trf.xlu0
    %v824 = vpop.trf.xlu0
    %v825 = vpop.trf.xlu0
    %v826 = vpop.trf.xlu0
    %v827 = vpop.trf.xlu0
    %v828 = vpop.trf.xlu0
    %v829 = vpop.trf.xlu0
    %v830 = vpop.trf.xlu0
    %v831 = vpop.trf.xlu0
    %v832 = vpop.trf.xlu0
    %v833 = vpop.trf.xlu0
    %v834 = vpop.trf.xlu0
    %v835 = vpop.trf.xlu0
    %836 = vst.msk [vmem:[#allocation2] sm:$0xff] %vm62, 0.0
    %837 = vst.msk [vmem:[#allocation2 + $0x8] sm:$0xff] %vm62, 0.0
    %840 = vrot.lane.b32.xlu0 %v820, 1
    %v841 = vpop.permute.xlu0 %840
    %842 = vrot.lane.b32.xlu0 %v821, 1
    %v843 = vpop.permute.xlu0 %842
    %vm846 = vcmask 64520
    %847 = vst.msk [vmem:[#allocation2] sm:$0xff] %vm846, %v841
    %848 = vst.msk [vmem:[#allocation2 + $0x8] sm:$0xff] %vm846, %v843
    %vm849 = vcmask 64512
    %850 = vst.msk [vmem:[#allocation2 + $0x10] sm:$0xff] %vm849, %v820
    %851 = vst.msk [vmem:[#allocation2 + $0x18] sm:$0xff] %vm849, %v821
    %vm852 = vcmask 64568
    %853 = vst.msk [vmem:[#allocation2 + $0x20] sm:$0xff] %vm852, 0.0
    %854 = vst.msk [vmem:[#allocation2 + $0x28] sm:$0xff] %vm852, 0.0
    %855 = vrot.lane.b32.xlu0 %v820, 127
    %v856 = vpop.permute.xlu0 %855
    %857 = vrot.lane.b32.xlu0 %v821, 127
    %v858 = vpop.permute.xlu0 %857
    %vm861 = vcmask 56320
    %862 = vst.msk [vmem:[#allocation2 + $0x20] sm:$0xff] %vm861, %v856
    %863 = vst.msk [vmem:[#allocation2 + $0x28] sm:$0xff] %vm861, %v858
    %vm864 = vcmask 72768
    %865 = vst.msk [vmem:[#allocation2] sm:$0xff] %vm864, 0.0
    %866 = vst.msk [vmem:[#allocation2 + $0x8] sm:$0xff] %vm864, 0.0
    %869 = vrot.lane.b32.xlu0 %v822, 9
    %v870 = vpop.permute.xlu0 %869
    %871 = vrot.lane.b32.xlu0 %v823, 9
    %v872 = vpop.permute.xlu0 %871
    %vm875 = vcmask 130120
    %876 = vst.msk [vmem:[#allocation2] sm:$0xff] %vm875, %v870
    %877 = vst.msk [vmem:[#allocation2 + $0x8] sm:$0xff] %vm875, %v872
    %878 = vrot.lane.b32.xlu0 %v822, 8
    %v879 = vpop.permute.xlu0 %878
    %880 = vrot.lane.b32.xlu0 %v823, 8
    %v881 = vpop.permute.xlu0 %880
    %vm884 = vcmask 130112
    %885 = vst.msk [vmem:[#allocation2 + $0x10] sm:$0xff] %vm884, %v879
    %886 = vst.msk [vmem:[#allocation2 + $0x18] sm:$0xff] %vm884, %v881
    %vm887 = vcmask 130168
    %888 = vst.msk [vmem:[#allocation2 + $0x20] sm:$0xff] %vm887, 0.0
    %889 = vst.msk [vmem:[#allocation2 + $0x28] sm:$0xff] %vm887, 0.0
    %890 = vrot.lane.b32.xlu0 %v822, 7
    %v891 = vpop.permute.xlu0 %890
    %892 = vrot.lane.b32.xlu0 %v823, 7
    %v893 = vpop.permute.xlu0 %892
    %vm896 = vcmask 121920
    %897 = vst.msk [vmem:[#allocation2 + $0x20] sm:$0xff] %vm896, %v891
    %898 = vst.msk [vmem:[#allocation2 + $0x28] sm:$0xff] %vm896, %v893
    %v899 = vld [vmem:[#allocation2] sm:$0xff]
    %v900 = vld [vmem:[#allocation2 + $0x8] sm:$0xff]
    %v901 = vld [vmem:[#allocation2 + $0x10] sm:$0xff]
    %v902 = vld [vmem:[#allocation2 + $0x18] sm:$0xff]
    %v903 = vld [vmem:[#allocation2 + $0x20] sm:$0xff]
    %v904 = vld [vmem:[#allocation2 + $0x28] sm:$0xff]
    %v905 = vld [vmem:[#allocation7] sm:$0xff]
    %v906 = vld [vmem:[#allocation7 + $0x8] sm:$0xf]
    %vm907 = vcmask 392192
    %v909 = vsel %vm907, %v905, 0
    %v912 = vsel %vm907, %v906, 0
    %914 = vmatprep.subr.mxu0 0.0
    %915 = vmatpush1.msra.mxu0 %v899
    %916 = vmatprep.subr.mxu0 0.0
    %917 = vmatpush1.msra.mxu0 %v900
    %918 = vmatprep.subr.mxu0 0.0
    %919 = vmatpush1.msra.mxu0 %v901
    %920 = vmatprep.subr.mxu0 0.0
    %921 = vmatpush1.msra.mxu0 %v902
    %922 = vmatprep.subr.mxu0 0.0
    %923 = vmatpush1.msra.mxu0 %v903
    %924 = vmatprep.subr.mxu0 0.0
    %925 = vmatpush1.msra.mxu0 %v904
    %926 = vmatprep.subr.mxu0 0.0
    %927 = vmatpush1.msra.mxu0 0.0
    %928 = vmatprep.subr.mxu0 0.0
    %929 = vmatpush1.msra.mxu0 0.0
    %930 = vmatprep.subr.mxu0 0.0
    %931 = vmatpush1.msra.mxu0 0.0
    %932 = vmatprep.subr.mxu0 0.0
    %933 = vmatpush1.msra.mxu0 0.0
    %934 = vmatprep.subr.mxu0 0.0
    %935 = vmatpush1.msra.mxu0 0.0
    %936 = vmatprep.subr.mxu0 0.0
    %937 = vmatpush1.msra.mxu0 0.0
    %938 = vmatprep.subr.mxu0 0.0
    %939 = vmatpush1.msra.mxu0 0.0
    %940 = vmatprep.subr.mxu0 0.0
    %941 = vmatpush1.msra.mxu0 0.0
    %942 = vmatprep.subr.mxu0 0.0
    %943 = vmatpush1.msra.mxu0 0.0
    %944 = vmatprep.subr.mxu0 0.0
    %945 = vmatpush1.msra.mxu0 0.0
    %946 = vmatprep.subr.mxu0 0.0
    %947 = vmatpush1.msra.mxu0 0.0
    %948 = vmatprep.subr.mxu0 0.0
    %949 = vmatpush1.msra.mxu0 0.0
    %950 = vmatprep.subr.mxu0 0.0
    %951 = vmatpush1.msra.mxu0 0.0
    %952 = vmatprep.subr.mxu0 0.0
    %953 = vmatpush1.msra.mxu0 0.0
    %954 = vmatprep.subr.mxu0 0.0
    %955 = vmatpush1.msra.mxu0 0.0
    %956 = vmatprep.subr.mxu0 0.0
    %957 = vmatpush1.msra.mxu0 0.0
    %958 = vmatprep.subr.mxu0 0.0
    %959 = vmatpush1.msra.mxu0 0.0
    %960 = vmatprep.subr.mxu0 0.0
    %961 = vmatpush1.msra.mxu0 0.0
    %962 = vmatprep.subr.mxu0 0.0
    %963 = vmatpush1.msra.mxu0 0.0
    %964 = vmatprep.subr.mxu0 0.0
    %965 = vmatpush1.msra.mxu0 0.0
    %966 = vmatprep.subr.mxu0 0.0
    %967 = vmatpush1.msra.mxu0 0.0
    %968 = vmatprep.subr.mxu0 0.0
    %969 = vmatpush1.msra.mxu0 0.0
    %970 = vmatprep.subr.mxu0 0.0
    %971 = vmatpush1.msra.mxu0 0.0
    %972 = vmatprep.subr.mxu0 0.0
    %973 = vmatpush1.msra.mxu0 0.0
    %974 = vmatprep.subr.mxu0 0.0
    %975 = vmatpush1.msra.mxu0 0.0
    %976 = vmatprep.subr.mxu0 0.0
    %977 = vmatpush1.msra.mxu0 0.0
    %978 = vmatprep.mubr.f32.mxu0 0.0
    %979 = vmatmul.mubr.f32.gmra.mrb[0].mxu0 %v909
    %v980 = vpop.f32.mrb[0].mxu0
    %v981 = vadd.f32 0.0, %v980
    %v982 = vpop.f32.mrb[0].mxu0
    %983 = vmatprep.mubr.f32.mxu0 0.0
    %984 = vmatmul.mubr.f32.gmra.mrb[0].mxu0 %v912
    %v985 = vpop.f32.mrb[0].mxu0
    %v986 = vadd.f32 0.0, %v985
    %v987 = vpop.f32.mrb[0].mxu0
    %988 = vdwg.mxu0
    %v989 = vmul.u32 %v198, 8
    %vm990 = vcmp.ge.s32.totalorder %v189, %v989
    %vm991 = vcmp.ge.s32.totalorder %v190, %v989
    %v992 = vadd.s32 %v989, 8
    %vm993 = vcmp.lt.s32.totalorder %v189, %v992
    %vm994 = vcmp.lt.s32.totalorder %v190, %v992
    %vm995 = vmand %vm990, %vm993
    %vm996 = vmand %vm991, %vm994
    %v997 = vsel %vm995, 1, 0
    %v998 = vsel %vm996, 1, 0
    %v999 = vcvt.s32.f32 %v997
    %v1000 = vcvt.s32.f32 %v998
    %v1001 = vmul.f32 %v999, 0.125
    %v1002 = vmul.f32 %v1000, 0.125
    %v1003 = vmul.u32 %v189, 8
    %vm1004 = vcmp.ge.s32.totalorder %v198, %v1003
    %v1005 = vadd.s32 %v1003, 8
    %vm1006 = vcmp.lt.s32.totalorder %v198, %v1005
    %vm1007 = vmand %vm1004, %vm1006
    %v1008 = vsel %vm1007, 1, 0
    %v1009 = vcvt.s32.f32 %v1008
    %vm1010 = vcmask 130048
    %v1012 = vsel %vm1010, %v981, 0
    %v1015 = vsel %vm1010, %v986, 0
    %1017 = vmatprep.subr.mxu0 0.0
    %1018 = vmatpush1.msra.mxu0 %v1001
    %1019 = vmatprep.subr.mxu0 0.0
    %1020 = vmatpush1.msra.mxu0 %v1002
    %1021 = vmatprep.subr.mxu0 0.0
    %1022 = vmatpush1.msra.mxu0 0.0
    %1023 = vmatprep.subr.mxu0 0.0
    %1024 = vmatpush1.msra.mxu0 0.0
    %1025 = vmatprep.subr.mxu0 0.0
    %1026 = vmatpush1.msra.mxu0 0.0
    %1027 = vmatprep.subr.mxu0 0.0
    %1028 = vmatpush1.msra.mxu0 0.0
    %1029 = vmatprep.subr.mxu0 0.0
    %1030 = vmatpush1.msra.mxu0 0.0
    %1031 = vmatprep.subr.mxu0 0.0
    %1032 = vmatpush1.msra.mxu0 0.0
    %1033 = vmatprep.subr.mxu0 0.0
    %1034 = vmatpush1.msra.mxu0 0.0
    %1035 = vmatprep.subr.mxu0 0.0
    %1036 = vmatpush1.msra.mxu0 0.0
    %1037 = vmatprep.subr.mxu0 0.0
    %1038 = vmatpush1.msra.mxu0 0.0
    %1039 = vmatprep.subr.mxu0 0.0
    %1040 = vmatpush1.msra.mxu0 0.0
    %1041 = vmatprep.subr.mxu0 0.0
    %1042 = vmatpush1.msra.mxu0 0.0
    %1043 = vmatprep.subr.mxu0 0.0
    %1044 = vmatpush1.msra.mxu0 0.0
    %1045 = vmatprep.subr.mxu0 0.0
    %1046 = vmatpush1.msra.mxu0 0.0
    %1047 = vmatprep.subr.mxu0 0.0
    %1048 = vmatpush1.msra.mxu0 0.0
    %1049 = vmatprep.subr.mxu0 0.0
    %1050 = vmatpush1.msra.mxu0 0.0
    %1051 = vmatprep.subr.mxu0 0.0
    %1052 = vmatpush1.msra.mxu0 0.0
    %1053 = vmatprep.subr.mxu0 0.0
    %1054 = vmatpush1.msra.mxu0 0.0
    %1055 = vmatprep.subr.mxu0 0.0
    %1056 = vmatpush1.msra.mxu0 0.0
    %1057 = vmatprep.subr.mxu0 0.0
    %1058 = vmatpush1.msra.mxu0 0.0
    %1059 = vmatprep.subr.mxu0 0.0
    %1060 = vmatpush1.msra.mxu0 0.0
    %1061 = vmatprep.subr.mxu0 0.0
    %1062 = vmatpush1.msra.mxu0 0.0
    %1063 = vmatprep.subr.mxu0 0.0
    %1064 = vmatpush1.msra.mxu0 0.0
    %1065 = vmatprep.subr.mxu0 0.0
    %1066 = vmatpush1.msra.mxu0 0.0
    %1067 = vmatprep.subr.mxu0 0.0
    %1068 = vmatpush1.msra.mxu0 0.0
    %1069 = vmatprep.subr.mxu0 0.0
    %1070 = vmatpush1.msra.mxu0 0.0
    %1071 = vmatprep.subr.mxu0 0.0
    %1072 = vmatpush1.msra.mxu0 0.0
    %1073 = vmatprep.subr.mxu0 0.0
    %1074 = vmatpush1.msra.mxu0 0.0
    %1075 = vmatprep.subr.mxu0 0.0
    %1076 = vmatpush1.msra.mxu0 0.0
    %1077 = vmatprep.subr.mxu0 0.0
    %1078 = vmatpush1.msra.mxu0 0.0
    %1079 = vmatprep.subr.mxu0 0.0
    %1080 = vmatpush1.msra.mxu0 0.0
    %1081 = vmatprep.mubr.f32.mxu0 0.0
    %1082 = vmatmul.mubr.f32.gmra.mrb[0].mxu0 %v1012
    %v1083 = vpop.f32.mrb[0].mxu0
    %v1084 = vadd.f32 0.0, %v1083
    %v1085 = vpop.f32.mrb[0].mxu0
    %1086 = vmatprep.mubr.f32.mxu0 0.0
    %1087 = vmatmul.mubr.f32.gmra.mrb[0].mxu0 %v1015
    %v1088 = vpop.f32.mrb[0].mxu0
    %v1089 = vadd.f32 0.0, %v1088
    %v1090 = vpop.f32.mrb[0].mxu0
    %1091 = vdwg.mxu0
    %v1093 = vsel %vm338, %v1084, 0
    %v1096 = vsel %vm338, %v1089, 0
    %v1099 = vsel %vm345, %v1009, 0
    %1101 = vmatprep.subr.mxu0 0.0
    %1102 = vmatpush1.msra.mxu0 %v1099
    %1103 = vmatprep.subr.mxu0 0.0
    %1104 = vmatpush1.msra.mxu0 0.0
    %1105 = vmatprep.subr.mxu0 0.0
    %1106 = vmatpush1.msra.mxu0 0.0
    %1107 = vmatprep.subr.mxu0 0.0
    %1108 = vmatpush1.msra.mxu0 0.0
    %1109 = vmatprep.subr.mxu0 0.0
    %1110 = vmatpush1.msra.mxu0 0.0
    %1111 = vmatprep.subr.mxu0 0.0
    %1112 = vmatpush1.msra.mxu0 0.0
    %1113 = vmatprep.subr.mxu0 0.0
    %1114 = vmatpush1.msra.mxu0 0.0
    %1115 = vmatprep.subr.mxu0 0.0
    %1116 = vmatpush1.msra.mxu0 0.0
    %1117 = vmatprep.subr.mxu0 0.0
    %1118 = vmatpush1.msra.mxu0 0.0
    %1119 = vmatprep.subr.mxu0 0.0
    %1120 = vmatpush1.msra.mxu0 0.0
    %1121 = vmatprep.subr.mxu0 0.0
    %1122 = vmatpush1.msra.mxu0 0.0
    %1123 = vmatprep.subr.mxu0 0.0
    %1124 = vmatpush1.msra.mxu0 0.0
    %1125 = vmatprep.subr.mxu0 0.0
    %1126 = vmatpush1.msra.mxu0 0.0
    %1127 = vmatprep.subr.mxu0 0.0
    %1128 = vmatpush1.msra.mxu0 0.0
    %1129 = vmatprep.subr.mxu0 0.0
    %1130 = vmatpush1.msra.mxu0 0.0
    %1131 = vmatprep.subr.mxu0 0.0
    %1132 = vmatpush1.msra.mxu0 0.0
    %1133 = vmatprep.subr.mxu0 0.0
    %1134 = vmatpush1.msra.mxu0 0.0
    %1135 = vmatprep.subr.mxu0 0.0
    %1136 = vmatpush1.msra.mxu0 0.0
    %1137 = vmatprep.subr.mxu0 0.0
    %1138 = vmatpush1.msra.mxu0 0.0
    %1139 = vmatprep.subr.mxu0 0.0
    %1140 = vmatpush1.msra.mxu0 0.0
    %1141 = vmatprep.subr.mxu0 0.0
    %1142 = vmatpush1.msra.mxu0 0.0
    %1143 = vmatprep.subr.mxu0 0.0
    %1144 = vmatpush1.msra.mxu0 0.0
    %1145 = vmatprep.subr.mxu0 0.0
    %1146 = vmatpush1.msra.mxu0 0.0
    %1147 = vmatprep.subr.mxu0 0.0
    %1148 = vmatpush1.msra.mxu0 0.0
    %1149 = vmatprep.subr.mxu0 0.0
    %1150 = vmatpush1.msra.mxu0 0.0
    %1151 = vmatprep.subr.mxu0 0.0
    %1152 = vmatpush1.msra.mxu0 0.0
    %1153 = vmatprep.subr.mxu0 0.0
    %1154 = vmatpush1.msra.mxu0 0.0
    %1155 = vmatprep.subr.mxu0 0.0
    %1156 = vmatpush1.msra.mxu0 0.0
    %1157 = vmatprep.subr.mxu0 0.0
    %1158 = vmatpush1.msra.mxu0 0.0
    %1159 = vmatprep.subr.mxu0 0.0
    %1160 = vmatpush1.msra.mxu0 0.0
    %1161 = vmatprep.subr.mxu0 0.0
    %1162 = vmatpush1.msra.mxu0 0.0
    %1163 = vmatprep.subr.mxu0 0.0
    %1164 = vmatpush1.msra.mxu0 0.0
    %1165 = vmatprep.mubr.f32.mxu0 0.0
    %1166 = vmatmul.mubr.f32.gmra.mrb[0].mxu0 %v1093
    %v1167 = vpop.f32.mrb[0].mxu0
    %v1168 = vadd.f32 0.0, %v1167
    %v1169 = vpop.f32.mrb[0].mxu0
    %1170 = vmatprep.mubr.f32.mxu0 0.0
    %1171 = vmatmul.mubr.f32.gmra.mrb[0].mxu0 %v1096
    %v1172 = vpop.f32.mrb[0].mxu0
    %v1173 = vadd.f32 0.0, %v1172
    %v1174 = vpop.f32.mrb[0].mxu0
    %1175 = vdwg.mxu0
    %v1176 = vsub.f32 %v981, %v1168
    %v1177 = vsub.f32 %v986, %v1173
    %v1178 = vmul.f32 %v1176, %v1176
    %v1179 = vmul.f32 %v1177, %v1177
    %v1181 = vsel %vm1010, %v1178, 0
    %v1184 = vsel %vm1010, %v1179, 0
    %1186 = vmatprep.subr.mxu0 0.0
    %1187 = vmatpush1.msra.mxu0 %v1001
    %1188 = vmatprep.subr.mxu0 0.0
    %1189 = vmatpush1.msra.mxu0 %v1002
    %1190 = vmatprep.subr.mxu0 0.0
    %1191 = vmatpush1.msra.mxu0 0.0
    %1192 = vmatprep.subr.mxu0 0.0
    %1193 = vmatpush1.msra.mxu0 0.0
    %1194 = vmatprep.subr.mxu0 0.0
    %1195 = vmatpush1.msra.mxu0 0.0
    %1196 = vmatprep.subr.mxu0 0.0
    %1197 = vmatpush1.msra.mxu0 0.0
    %1198 = vmatprep.subr.mxu0 0.0
    %1199 = vmatpush1.msra.mxu0 0.0
    %1200 = vmatprep.subr.mxu0 0.0
    %1201 = vmatpush1.msra.mxu0 0.0
    %1202 = vmatprep.subr.mxu0 0.0
    %1203 = vmatpush1.msra.mxu0 0.0
    %1204 = vmatprep.subr.mxu0 0.0
    %1205 = vmatpush1.msra.mxu0 0.0
    %1206 = vmatprep.subr.mxu0 0.0
    %1207 = vmatpush1.msra.mxu0 0.0
    %1208 = vmatprep.subr.mxu0 0.0
    %1209 = vmatpush1.msra.mxu0 0.0
    %1210 = vmatprep.subr.mxu0 0.0
    %1211 = vmatpush1.msra.mxu0 0.0
    %1212 = vmatprep.subr.mxu0 0.0
    %1213 = vmatpush1.msra.mxu0 0.0
    %1214 = vmatprep.subr.mxu0 0.0
    %1215 = vmatpush1.msra.mxu0 0.0
    %1216 = vmatprep.subr.mxu0 0.0
    %1217 = vmatpush1.msra.mxu0 0.0
    %1218 = vmatprep.subr.mxu0 0.0
    %1219 = vmatpush1.msra.mxu0 0.0
    %1220 = vmatprep.subr.mxu0 0.0
    %1221 = vmatpush1.msra.mxu0 0.0
    %1222 = vmatprep.subr.mxu0 0.0
    %1223 = vmatpush1.msra.mxu0 0.0
    %1224 = vmatprep.subr.mxu0 0.0
    %1225 = vmatpush1.msra.mxu0 0.0
    %1226 = vmatprep.subr.mxu0 0.0
    %1227 = vmatpush1.msra.mxu0 0.0
    %1228 = vmatprep.subr.mxu0 0.0
    %1229 = vmatpush1.msra.mxu0 0.0
    %1230 = vmatprep.subr.mxu0 0.0
    %1231 = vmatpush1.msra.mxu0 0.0
    %1232 = vmatprep.subr.mxu0 0.0
    %1233 = vmatpush1.msra.mxu0 0.0
    %1234 = vmatprep.subr.mxu0 0.0
    %1235 = vmatpush1.msra.mxu0 0.0
    %1236 = vmatprep.subr.mxu0 0.0
    %1237 = vmatpush1.msra.mxu0 0.0
    %1238 = vmatprep.subr.mxu0 0.0
    %1239 = vmatpush1.msra.mxu0 0.0
    %1240 = vmatprep.subr.mxu0 0.0
    %1241 = vmatpush1.msra.mxu0 0.0
    %1242 = vmatprep.subr.mxu0 0.0
    %1243 = vmatpush1.msra.mxu0 0.0
    %1244 = vmatprep.subr.mxu0 0.0
    %1245 = vmatpush1.msra.mxu0 0.0
    %1246 = vmatprep.subr.mxu0 0.0
    %1247 = vmatpush1.msra.mxu0 0.0
    %1248 = vmatprep.subr.mxu0 0.0
    %1249 = vmatpush1.msra.mxu0 0.0
    %1250 = vmatprep.mubr.f32.mxu0 0.0
    %1251 = vmatmul.mubr.f32.gmra.mrb[0].mxu0 %v1181
    %v1252 = vpop.f32.mrb[0].mxu0
    %v1253 = vadd.f32 0.0, %v1252
    %v1254 = vpop.f32.mrb[0].mxu0
    %1255 = vmatprep.mubr.f32.mxu0 0.0
    %1256 = vmatmul.mubr.f32.gmra.mrb[0].mxu0 %v1184
    %v1257 = vpop.f32.mrb[0].mxu0
    %v1258 = vadd.f32 0.0, %v1257
    %v1259 = vpop.f32.mrb[0].mxu0
    %1260 = vdwg.mxu0
    %v1261 = vld [vmem:[%s4] sm:$0x3]
    %v1263 = vsel %vm338, %v1253, 0
    %v1266 = vsel %vm338, %v1258, 0
    %1268 = vmatprep.subr.mxu0 0.0
    %1269 = vmatpush1.msra.mxu0 %v1099
    %1270 = vmatprep.subr.mxu0 0.0
    %1271 = vmatpush1.msra.mxu0 0.0
    %1272 = vmatprep.subr.mxu0 0.0
    %1273 = vmatpush1.msra.mxu0 0.0
    %1274 = vmatprep.subr.mxu0 0.0
    %1275 = vmatpush1.msra.mxu0 0.0
    %1276 = vmatprep.subr.mxu0 0.0
    %1277 = vmatpush1.msra.mxu0 0.0
    %1278 = vmatprep.subr.mxu0 0.0
    %1279 = vmatpush1.msra.mxu0 0.0
    %1280 = vmatprep.subr.mxu0 0.0
    %1281 = vmatpush1.msra.mxu0 0.0
    %1282 = vmatprep.subr.mxu0 0.0
    %1283 = vmatpush1.msra.mxu0 0.0
    %1284 = vmatprep.subr.mxu0 0.0
    %1285 = vmatpush1.msra.mxu0 0.0
    %1286 = vmatprep.subr.mxu0 0.0
    %1287 = vmatpush1.msra.mxu0 0.0
    %1288 = vmatprep.subr.mxu0 0.0
    %1289 = vmatpush1.msra.mxu0 0.0
    %1290 = vmatprep.subr.mxu0 0.0
    %1291 = vmatpush1.msra.mxu0 0.0
    %1292 = vmatprep.subr.mxu0 0.0
    %1293 = vmatpush1.msra.mxu0 0.0
    %1294 = vmatprep.subr.mxu0 0.0
    %1295 = vmatpush1.msra.mxu0 0.0
    %1296 = vmatprep.subr.mxu0 0.0
    %1297 = vmatpush1.msra.mxu0 0.0
    %1298 = vmatprep.subr.mxu0 0.0
    %1299 = vmatpush1.msra.mxu0 0.0
    %1300 = vmatprep.subr.mxu0 0.0
    %1301 = vmatpush1.msra.mxu0 0.0
    %1302 = vmatprep.subr.mxu0 0.0
    %1303 = vmatpush1.msra.mxu0 0.0
    %1304 = vmatprep.subr.mxu0 0.0
    %1305 = vmatpush1.msra.mxu0 0.0
    %1306 = vmatprep.subr.mxu0 0.0
    %1307 = vmatpush1.msra.mxu0 0.0
    %1308 = vmatprep.subr.mxu0 0.0
    %1309 = vmatpush1.msra.mxu0 0.0
    %1310 = vmatprep.subr.mxu0 0.0
    %1311 = vmatpush1.msra.mxu0 0.0
    %1312 = vmatprep.subr.mxu0 0.0
    %1313 = vmatpush1.msra.mxu0 0.0
    %1314 = vmatprep.subr.mxu0 0.0
    %1315 = vmatpush1.msra.mxu0 0.0
    %1316 = vmatprep.subr.mxu0 0.0
    %1317 = vmatpush1.msra.mxu0 0.0
    %1318 = vmatprep.subr.mxu0 0.0
    %1319 = vmatpush1.msra.mxu0 0.0
    %1320 = vmatprep.subr.mxu0 0.0
    %1321 = vmatpush1.msra.mxu0 0.0
    %1322 = vmatprep.subr.mxu0 0.0
    %1323 = vmatpush1.msra.mxu0 0.0
    %1324 = vmatprep.subr.mxu0 0.0
    %1325 = vmatpush1.msra.mxu0 0.0
    %1326 = vmatprep.subr.mxu0 0.0
    %1327 = vmatpush1.msra.mxu0 0.0
    %1328 = vmatprep.subr.mxu0 0.0
    %1329 = vmatpush1.msra.mxu0 0.0
    %1330 = vmatprep.subr.mxu0 0.0
    %1331 = vmatpush1.msra.mxu0 0.0
    %1332 = vmatprep.mubr.f32.mxu0 0.0
    %1333 = vmatmul.mubr.f32.gmra.mrb[0].mxu0 %v1263
    %v1334 = vpop.f32.mrb[0].mxu0
    %v1335 = vadd.f32 1e-05, %v1334
    %v1336 = vpop.f32.mrb[0].mxu0
    %1337 = vmatprep.mubr.f32.mxu0 0.0
    %1338 = vmatmul.mubr.f32.gmra.mrb[0].mxu0 %v1266
    %v1339 = vpop.f32.mrb[0].mxu0
    %v1340 = vadd.f32 1e-05, %v1339
    %v1341 = vpop.f32.mrb[0].mxu0
    %1342 = vdwg.mxu0
    %v1343 = vrsqrt.pop %v1335
    %v1344 = vrsqrt.pop %v1340
    %v1345 = vmul.f32 %v1176, %v1343
    %v1346 = vmul.f32 %v1177, %v1344
    %v1347 = vlaneseq
    %v1348 = vshrl.u32 %v1347, 7
    %v1349 = vsub.s32 0, %v1348
    %v1350 = vrot.slane %v1261, %v1349
    %v1351 = vmul.f32 %v1345, %v1350
    %v1352 = vmul.f32 %v1346, %v1350
    %v1353 = vlaneseq
    %v1354 = vshrl.u32 %v1353, 7
    %v1355 = vsub.s32 1, %v1354
    %v1356 = vrot.slane %v1261, %v1355
    %v1357 = vadd.f32 %v1351, %v1356
    %v1358 = vadd.f32 %v1352, %v1356
    %v1359 = vmax.f32 %v1357, 0.0
    %v1360 = vmax.f32 %v1358, 0.0
    %v1363 = vrot.slane %v1359, 6
    %v1364 = vrot.slane %v1360, 6
    %v1365 = vsel %vm345, %v1363, %v1364
    %v1367 = vmax.f32 %v1359, %v1365
    %v1369 = vsel %vm1010, %v1367, 0
    %1371 = vmatprep.subr.mxu0 0.0
    %1372 = vmatpush1.msra.mxu0 %v627
    %1373 = vmatprep.subr.mxu0 0.0
    %1374 = vmatpush1.msra.mxu0 %v628
    %1375 = vmatprep.subr.mxu0 0.0
    %1376 = vmatpush1.msra.mxu0 0.0
    %1377 = vmatprep.subr.mxu0 0.0
    %1378 = vmatpush1.msra.mxu0 0.0
    %1379 = vmatprep.subr.mxu0 0.0
    %1380 = vmatpush1.msra.mxu0 0.0
    %1381 = vmatprep.subr.mxu0 0.0
    %1382 = vmatpush1.msra.mxu0 0.0
    %1383 = vmatprep.subr.mxu0 0.0
    %1384 = vmatpush1.msra.mxu0 0.0
    %1385 = vmatprep.subr.mxu0 0.0
    %1386 = vmatpush1.msra.mxu0 0.0
    %1387 = vmatprep.subr.mxu0 0.0
    %1388 = vmatpush1.msra.mxu0 0.0
    %1389 = vmatprep.subr.mxu0 0.0
    %1390 = vmatpush1.msra.mxu0 0.0
    %1391 = vmatprep.subr.mxu0 0.0
    %1392 = vmatpush1.msra.mxu0 0.0
    %1393 = vmatprep.subr.mxu0 0.0
    %1394 = vmatpush1.msra.mxu0 0.0
    %1395 = vmatprep.subr.mxu0 0.0
    %1396 = vmatpush1.msra.mxu0 0.0
    %1397 = vmatprep.subr.mxu0 0.0
    %1398 = vmatpush1.msra.mxu0 0.0
    %1399 = vmatprep.subr.mxu0 0.0
    %1400 = vmatpush1.msra.mxu0 0.0
    %1401 = vmatprep.subr.mxu0 0.0
    %1402 = vmatpush1.msra.mxu0 0.0
    %1403 = vmatprep.subr.mxu0 0.0
    %1404 = vmatpush1.msra.mxu0 0.0
    %1405 = vmatprep.subr.mxu0 0.0
    %1406 = vmatpush1.msra.mxu0 0.0
    %1407 = vmatprep.subr.mxu0 0.0
    %1408 = vmatpush1.msra.mxu0 0.0
    %1409 = vmatprep.subr.mxu0 0.0
    %1410 = vmatpush1.msra.mxu0 0.0
    %1411 = vmatprep.subr.mxu0 0.0
    %1412 = vmatpush1.msra.mxu0 0.0
    %1413 = vmatprep.subr.mxu0 0.0
    %1414 = vmatpush1.msra.mxu0 0.0
    %1415 = vmatprep.subr.mxu0 0.0
    %1416 = vmatpush1.msra.mxu0 0.0
    %1417 = vmatprep.subr.mxu0 0.0
    %1418 = vmatpush1.msra.mxu0 0.0
    %1419 = vmatprep.subr.mxu0 0.0
    %1420 = vmatpush1.msra.mxu0 0.0
    %1421 = vmatprep.subr.mxu0 0.0
    %1422 = vmatpush1.msra.mxu0 0.0
    %1423 = vmatprep.subr.mxu0 0.0
    %1424 = vmatpush1.msra.mxu0 0.0
    %1425 = vmatprep.subr.mxu0 0.0
    %1426 = vmatpush1.msra.mxu0 0.0
    %1427 = vmatprep.subr.mxu0 0.0
    %1428 = vmatpush1.msra.mxu0 0.0
    %1429 = vmatprep.subr.mxu0 0.0
    %1430 = vmatpush1.msra.mxu0 0.0
    %1431 = vmatprep.subr.mxu0 0.0
    %1432 = vmatpush1.msra.mxu0 0.0
    %1433 = vmatprep.subr.mxu0 0.0
    %1434 = vmatpush1.msra.mxu0 0.0
    %1435 = vmatprep.mubr.f32.mxu0 0.0
    %1436 = vmatmul.mubr.f32.gmra.mrb[0].mxu0 %v1369
    %v1437 = vpop.f32.mrb[0].mxu0
    %v1438 = vadd.f32 0.0, %v1437
    %v1439 = vpop.f32.mrb[0].mxu0
    %1440 = vdwg.mxu0
    %1441 = vmatprep.subr.mxu0 0.0
    %1442 = vmatpush1.msra.mxu0 %v725
    %1443 = vmatprep.subr.mxu0 0.0
    %1444 = vmatpush1.msra.mxu0 %v726
    %1445 = vmatprep.subr.mxu0 0.0
    %1446 = vmatpush1.msra.mxu0 0.0
    %1447 = vmatprep.subr.mxu0 0.0
    %1448 = vmatpush1.msra.mxu0 0.0
    %1449 = vmatprep.subr.mxu0 0.0
    %1450 = vmatpush1.msra.mxu0 0.0
    %1451 = vmatprep.subr.mxu0 0.0
    %1452 = vmatpush1.msra.mxu0 0.0
    %1453 = vmatprep.subr.mxu0 0.0
    %1454 = vmatpush1.msra.mxu0 0.0
    %1455 = vmatprep.subr.mxu0 0.0
    %1456 = vmatpush1.msra.mxu0 0.0
    %1457 = vmatprep.subr.mxu0 0.0
    %1458 = vmatpush1.msra.mxu0 0.0
    %1459 = vmatprep.subr.mxu0 0.0
    %1460 = vmatpush1.msra.mxu0 0.0
    %1461 = vmatprep.subr.mxu0 0.0
    %1462 = vmatpush1.msra.mxu0 0.0
    %1463 = vmatprep.subr.mxu0 0.0
    %1464 = vmatpush1.msra.mxu0 0.0
    %1465 = vmatprep.subr.mxu0 0.0
    %1466 = vmatpush1.msra.mxu0 0.0
    %1467 = vmatprep.subr.mxu0 0.0
    %1468 = vmatpush1.msra.mxu0 0.0
    %1469 = vmatprep.subr.mxu0 0.0
    %1470 = vmatpush1.msra.mxu0 0.0
    %1471 = vmatprep.subr.mxu0 0.0
    %1472 = vmatpush1.msra.mxu0 0.0
    %1473 = vmatprep.subr.mxu0 0.0
    %1474 = vmatpush1.msra.mxu0 0.0
    %1475 = vmatprep.subr.mxu0 0.0
    %1476 = vmatpush1.msra.mxu0 0.0
    %1477 = vmatprep.subr.mxu0 0.0
    %1478 = vmatpush1.msra.mxu0 0.0
    %1479 = vmatprep.subr.mxu0 0.0
    %1480 = vmatpush1.msra.mxu0 0.0
    %1481 = vmatprep.subr.mxu0 0.0
    %1482 = vmatpush1.msra.mxu0 0.0
    %1483 = vmatprep.subr.mxu0 0.0
    %1484 = vmatpush1.msra.mxu0 0.0
    %1485 = vmatprep.subr.mxu0 0.0
    %1486 = vmatpush1.msra.mxu0 0.0
    %1487 = vmatprep.subr.mxu0 0.0
    %1488 = vmatpush1.msra.mxu0 0.0
    %1489 = vmatprep.subr.mxu0 0.0
    %1490 = vmatpush1.msra.mxu0 0.0
    %1491 = vmatprep.subr.mxu0 0.0
    %1492 = vmatpush1.msra.mxu0 0.0
    %1493 = vmatprep.subr.mxu0 0.0
    %1494 = vmatpush1.msra.mxu0 0.0
    %1495 = vmatprep.subr.mxu0 0.0
    %1496 = vmatpush1.msra.mxu0 0.0
    %1497 = vmatprep.subr.mxu0 0.0
    %1498 = vmatpush1.msra.mxu0 0.0
    %1499 = vmatprep.subr.mxu0 0.0
    %1500 = vmatpush1.msra.mxu0 0.0
    %1501 = vmatprep.subr.mxu0 0.0
    %1502 = vmatpush1.msra.mxu0 0.0
    %1503 = vmatprep.subr.mxu0 0.0
    %1504 = vmatpush1.msra.mxu0 0.0
    %1505 = vmatprep.mubr.f32.mxu0 0.0
    %1506 = vmatmul.mubr.f32.gmra.mrb[0].mxu0 %v1369
    %v1507 = vpop.f32.mrb[0].mxu0
    %v1508 = vadd.f32 0.0, %v1507
    %v1509 = vpop.f32.mrb[0].mxu0
    %1510 = vdwg.mxu0
    %v1511 = vmax.f32 %v1438, %v1508
    %vm1512 = vcmask 62464
    %1513 = vst.msk [vmem:[%s5] sm:$0x3f] %vm1512, %v1511
    // Predicated region
    $region34: #{tpu_custom_call.1} parent=1 // pred_check
      _
    $region35: #{tpu_custom_call.1} parent=1 // pred_check_branch
      %1515 = sbr.rel (0) target = $region37
    $region36: #{tpu_custom_call.1} parent=1 // pred_region
      _
    $region37: #{tpu_custom_call.1} parent=1 // pred_fallthru
      _
    // Predicated region
    $region38: #{tpu_custom_call.1} parent=1 // pred_check
      _
    $region39: #{tpu_custom_call.1} parent=1 // pred_check_branch
      %1517 = sbr.rel (0) target = $region41
    $region40: #{tpu_custom_call.1} parent=1 // pred_region
      _
    $region41: #{tpu_custom_call.1} parent=1 // pred_fallthru
      _
    %1518 = vsyncpa [#allocation4], 1
    %1519 = vsyncpa [#allocation6], 1

</llo_original>
